<compile_context>
chip_gen: v7x
topology: tpu7x:2x2x1
jax: 0.10.0
libtpu: 0.0.40
codegen_flags: <defaults>
</compile_context>

<pallas_src>
import math

import jax
import jax.numpy as jnp
import numpy as np
from jax import lax
from jax.experimental import pallas as pl
from jax.experimental.pallas import tpu as pltpu


def _mhga_kernel(q_ref, k_ref, v_ref, wo_ref, bo_ref, hb_ref, invdeg_ref,
                 src_ref, dst_ref, ew_ref,
                 out_ref,
                 acc_s):
    e = pl.program_id(0)                      # edge tile index (reduction axis)
    n_nodes = q_ref.shape[0]
    te = src_ref.shape[0]

    # ---- once per call: zero the full-graph scatter accumulator -----------------
    @pl.when(e == 0)
    def _init():
        acc_s[...] = jnp.zeros_like(acc_s)

    # ---- per-edge-tile work (executes once per edge tile, no node-tile axis) ----
    src_ids = src_ref[...]                                                 # [TE, 1] int32
    dst_ids = dst_ref[...]                                                 # [TE, 1] int32

    # one-hot gather tiles built in-kernel (padded edges use index -1 -> all-zero rows)
    node_iota = lax.broadcasted_iota(jnp.int32, (te, n_nodes), 1)
    src_oh = (node_iota == src_ids).astype(jnp.bfloat16)                   # [TE, N]
    dst_oh = (node_iota == dst_ids).astype(jnp.bfloat16)                   # [TE, N]

    # gathers via lane-dense one-hot matmuls; results are exact bf16 row copies,
    # so the immediate bf16 cast is lossless and halves vreg footprint.
    q_i = jnp.dot(src_oh, q_ref[...],
                  preferred_element_type=jnp.float32).astype(jnp.bfloat16)  # [TE, D]
    k_j = jnp.dot(dst_oh, k_ref[...],
                  preferred_element_type=jnp.float32).astype(jnp.bfloat16)  # [TE, D]
    v_j = jnp.dot(dst_oh, v_ref[...],
                  preferred_element_type=jnp.float32).astype(jnp.bfloat16)  # [TE, D]

    # per-head dot product, broadcast back over each head's D lanes in ONE lane-dense
    # matmul: head_block[a, b] = 1 iff dims a, b belong to the same head.
    # (On a v5e MXU-bound profile this could move to the XLU as a reshaped per-head sum.)
    prod = q_i * k_j                                                        # [TE, D] bf16
    scores_full = jnp.dot(prod, hb_ref[...],
                          preferred_element_type=jnp.float32)               # [TE, D] f32
    scores_full = scores_full * ew_ref[...]                                 # [TE, 1] edge gate
    weighted = (v_j * scores_full).astype(jnp.bfloat16)                     # [TE, D]

    # scatter-add over destination nodes, reusing dst_oh: dst_oh^T @ weighted
    acc_s[...] += lax.dot_general(dst_oh, weighted,
                                  (((0,), (0,)), ((), ())),
                                  preferred_element_type=jnp.float32)       # [N, D]

    # ---- finalize: scatter-mean + output projection ------------------------------
    @pl.when(e == pl.num_programs(0) - 1)
    def _finalize():
        out_nodes = acc_s[...] * invdeg_ref[...]                            # [N, D]
        out_ref[...] = (jnp.dot(out_nodes.astype(jnp.bfloat16), wo_ref[...],
                                preferred_element_type=jnp.float32)
                        + bo_ref[...])


def _estimate_vmem_limit_bytes(n_nodes, d_model, tile_e):
    """Shape-derived VMEM budget (replaces the old hard-coded 32 MiB)."""
    bf16, f32, lane = 2, 4, 128
    dbuf = 2                                           # Pallas double-buffers pipelined blocks
    qkv = 3 * dbuf * n_nodes * d_model * bf16          # resident Q/K/V inputs
    wts = dbuf * (2 * d_model * d_model * bf16 + d_model * f32)   # w_o + head_block + b_o
    invdeg = dbuf * n_nodes * lane * f32               # [N,1] block, lane-padded
    edges = 3 * dbuf * tile_e * lane * f32             # src/dst/ew [TE,1] blocks, lane-padded
    outblk = dbuf * n_nodes * d_model * f32            # output block
    acc = n_nodes * d_model * f32                      # f32 accumulator scratch
    est = qkv + wts + invdeg + edges + outblk + acc
    # 2x margin for compiler scratch/spills; clamp to a budget that is safe on every
    # generation that can hold this problem (v7x has 64 MiB total, v5e/v6e 128 MiB).
    return int(min(max(2 * est, 32 * 1024 * 1024), 100 * 1024 * 1024))


def multi_head_graph_attention(x, wq, wk, wv, wo, bo, edge_index, edge_attr,
                               n_heads, *, tile_e=256):
    """Host-side glue (Q/K/V projections, index padding, sigmoid gate, inverse degree,
    head block-map, bf16 casts) + one fused pallas_call over edge tiles."""
    N, D = x.shape
    assert D % n_heads == 0
    d_head = D // n_heads
    scale = 1.0 / math.sqrt(d_head)

    src = edge_index[0].astype(jnp.int32)
    dst = edge_index[1].astype(jnp.int32)
    E = src.shape[0]

    # pad edges to a multiple of tile_e; padded edges use index -1 => zero one-hot rows
    n_e = pl.cdiv(E, tile_e)
    e_pad = n_e * tile_e - E
    src_p = jnp.pad(src, (0, e_pad), constant_values=-1).reshape(-1, 1)
    dst_p = jnp.pad(dst, (0, e_pad), constant_values=-1).reshape(-1, 1)
    # TODO(synk): src/dst/ew could be packed into one [E_pad, 3] block (bitcasting the
    # gate) to save two tiny per-step DMAs; kept separate for simplicity.

    # edge gate sigmoid(sum(edge_attr, -1)) precomputed (tiny [E,1])
    if edge_attr is not None:
        ew = jax.nn.sigmoid(jnp.sum(edge_attr, axis=-1, keepdims=True)).astype(jnp.float32)
    else:
        ew = jnp.ones((E, 1), jnp.float32)
    ew_p = jnp.pad(ew, ((0, e_pad), (0, 0)))

    # per-destination-node inverse degree for the scatter-mean (real edges only)
    counts = jnp.zeros((N,), jnp.float32).at[dst].add(1.0)
    inv_deg = (1.0 / jnp.maximum(counts, 1.0)).reshape(N, 1)

    # block-diagonal head map: head_block[a, b] = 1 iff dims a, b in same head
    head_id = jnp.arange(D, dtype=jnp.int32) // d_head
    head_block = (head_id[:, None] == head_id[None, :]).astype(jnp.bfloat16)

    # Q/K/V projections hoisted out of the kernel (single bf16 XLA matmuls, f32 acc);
    # the 1/sqrt(d_head) scale is folded into Q.
    x_b = x.astype(jnp.bfloat16)
    q = (jnp.dot(x_b, wq.astype(jnp.bfloat16),
                 preferred_element_type=jnp.float32) * scale).astype(jnp.bfloat16)
    k = jnp.dot(x_b, wk.astype(jnp.bfloat16),
                preferred_element_type=jnp.float32).astype(jnp.bfloat16)
    v = jnp.dot(x_b, wv.astype(jnp.bfloat16),
                preferred_element_type=jnp.float32).astype(jnp.bfloat16)
    wo_b = wo.astype(jnp.bfloat16)
    bo_2d = bo.reshape(1, D).astype(jnp.float32)

    full = lambda e: (0, 0)            # grid-invariant blocks
    per_edge = lambda e: (e, 0)        # per-edge-tile blocks

    grid_spec = pltpu.PrefetchScalarGridSpec(
        num_scalar_prefetch=0,
        grid=(n_e,),                                # edge reduction axis only
        in_specs=[
            pl.BlockSpec((N, D), full),             # Q (bf16, pre-scaled)
            pl.BlockSpec((N, D), full),             # K (bf16)
            pl.BlockSpec((N, D), full),             # V (bf16)
            pl.BlockSpec((D, D), full),             # w_o (bf16)
            pl.BlockSpec((1, D), full),             # b_o (f32)
            pl.BlockSpec((D, D), full),             # head_block (bf16)
            pl.BlockSpec((N, 1), full),             # inverse degree (f32)
            pl.BlockSpec((tile_e, 1), per_edge),    # src indices
            pl.BlockSpec((tile_e, 1), per_edge),    # dst indices
            pl.BlockSpec((tile_e, 1), per_edge),    # edge gates
        ],
        out_specs=pl.BlockSpec((N, D), full),
        scratch_shapes=[
            pltpu.VMEM((N, D), jnp.float32),        # full-graph scatter accumulator
        ],
    )

    return pl.pallas_call(
        _mhga_kernel,
        out_shape=jax.ShapeDtypeStruct((N, D), jnp.float32),
        grid_spec=grid_spec,
        compiler_params=pltpu.CompilerParams(
            dimension_semantics=("arbitrary",),
            vmem_limit_bytes=_estimate_vmem_limit_bytes(N, D, tile_e),
        ),
    )(q, k, v, wo_b, bo_2d, head_block, inv_deg, src_p, dst_p, ew_p)


def reference_forward(x, wq, wk, wv, wo, bo, edge_index, edge_attr, n_heads):
    """Pure-JAX fp32 replica of the PyTorch forward (correctness check)."""
    N, D = x.shape
    d_head = D // n_heads
    scale = 1.0 / math.sqrt(d_head)
    Q = (x @ wq).reshape(N, n_heads, d_head)
    K = (x @ wk).reshape(N, n_heads, d_head)
    V = (x @ wv).reshape(N, n_heads, d_head)
    src, dst = edge_index[0], edge_index[1]
    q_i, k_j, v_j = Q[src], K[dst], V[dst]
    scores = (q_i * k_j).sum(-1) * scale                              # [E, H]
    ew = jax.nn.sigmoid(edge_attr.sum(-1, keepdims=True))             # [E, 1]
    scores = scores * ew
    weighted = v_j * scores[..., None]                                # [E, H, Dh]
    sums = jnp.zeros((N, n_heads, d_head)).at[dst].add(weighted)
    counts = jnp.zeros((N,)).at[dst].add(1.0)
    out = sums / jnp.maximum(counts, 1.0)[:, None, None]
    return out.reshape(N, D) @ wo + bo


if __name__ == "__main__":
    key = jax.random.PRNGKey(0)
    N = 128          # number of graph nodes ("batch_size" in the PyTorch module)
    d_model = 128
    n_heads = 4
    E = 300          # edges: not a multiple of tile_e and > tile_e -> exercises
                     # both padding and multi-tile accumulation
    d_edge = 8       # edge_attr feature dim

    ks = jax.random.split(key, 9)
    x = jax.random.normal(ks[0], (N, d_model), jnp.float32)
    # weights stored already transposed so forward is x @ W (deterministic init)
    wq = jax.random.normal(ks[1], (d_model, d_model), jnp.float32) * 0.1
    wk = jax.random.normal(ks[2], (d_model, d_model), jnp.float32) * 0.1
    wv = jax.random.normal(ks[3], (d_model, d_model), jnp.float32) * 0.1
    wo = jax.random.normal(ks[4], (d_model, d_model), jnp.float32) * 0.1
    bo = jax.random.normal(ks[5], (d_model,), jnp.float32) * 0.1
    src = jax.random.randint(ks[6], (E,), 0, N, dtype=jnp.int32)
    dst = jax.random.randint(ks[7], (E,), 0, N, dtype=jnp.int32)
    edge_index = jnp.stack([src, dst], axis=0)                        # [2, E]
    edge_attr = jax.random.normal(ks[8], (E, d_edge), jnp.float32)

    out = multi_head_graph_attention(x, wq, wk, wv, wo, bo, edge_index,
                                     edge_attr, n_heads)
    out = jax.block_until_ready(out)

    ref = reference_forward(x, wq, wk, wv, wo, bo, edge_index, edge_attr, n_heads)
    # bf16 MXU operands (f32 accumulation) vs fp32 reference -> loosened tolerance.
    np.testing.assert_allclose(np.asarray(out), np.asarray(ref), rtol=5e-2, atol=5e-2)
    print("KERNEL_OK")
</pallas_src>

<mosaic_0001>
module attributes {stable_mosaic.version = 11 : i64} {
  func.func @_mhga_kernel(%arg0: i32, %arg1: memref<128x128xbf16, #tpu.memory_space<vmem>>, %arg2: memref<128x128xbf16, #tpu.memory_space<vmem>>, %arg3: memref<128x128xbf16, #tpu.memory_space<vmem>>, %arg4: memref<128x128xbf16, #tpu.memory_space<vmem>>, %arg5: memref<1x128xf32, #tpu.memory_space<vmem>>, %arg6: memref<128x128xbf16, #tpu.memory_space<vmem>>, %arg7: memref<128x1xf32, #tpu.memory_space<vmem>>, %arg8: memref<256x1xi32, #tpu.memory_space<vmem>>, %arg9: memref<256x1xi32, #tpu.memory_space<vmem>>, %arg10: memref<256x1xf32, #tpu.memory_space<vmem>>, %arg11: memref<128x128xf32, #tpu.memory_space<vmem>>, %arg12: memref<128x128xf32, #tpu.memory_space<vmem>>) attributes {dimension_semantics = [#tpu.dimension_semantics<arbitrary>], iteration_bounds = array<i64: 2>, scalar_prefetch = 0 : i64, scratch_operands = 1 : i64, tpu.core_type = #tpu.core_type<tc>, window_params = [{pipeline_mode = #tpu.pipeline_mode<synchronous>, transform_indices = @transform_0, window_bounds = array<i64: 128, 128>}, {pipeline_mode = #tpu.pipeline_mode<synchronous>, transform_indices = @transform_1, window_bounds = array<i64: 128, 128>}, {pipeline_mode = #tpu.pipeline_mode<synchronous>, transform_indices = @transform_2, window_bounds = array<i64: 128, 128>}, {pipeline_mode = #tpu.pipeline_mode<synchronous>, transform_indices = @transform_3, window_bounds = array<i64: 128, 128>}, {pipeline_mode = #tpu.pipeline_mode<synchronous>, transform_indices = @transform_4, window_bounds = array<i64: 1, 128>}, {pipeline_mode = #tpu.pipeline_mode<synchronous>, transform_indices = @transform_5, window_bounds = array<i64: 128, 128>}, {pipeline_mode = #tpu.pipeline_mode<synchronous>, transform_indices = @transform_6, window_bounds = array<i64: 128, 1>}, {transform_indices = @transform_7, window_bounds = array<i64: 256, 1>}, {transform_indices = @transform_8, window_bounds = array<i64: 256, 1>}, {transform_indices = @transform_9, window_bounds = array<i64: 256, 1>}, {pipeline_mode = #tpu.pipeline_mode<synchronous>, transform_indices = @transform_10, window_bounds = array<i64: 128, 128>}]} {
    %c0_i32 = arith.constant 0 : i32
    %0 = arith.cmpi eq, %arg0, %c0_i32 : i32
    %1 = arith.extui %0 : i1 to i32
    %c0_i32_0 = arith.constant 0 : i32
    %2 = arith.cmpi ne, %1, %c0_i32_0 : i32
    scf.if %2 {
      %cst_23 = arith.constant 0.000000e+00 : f32
      %41 = vector.broadcast %cst_23 : f32 to vector<128x128xf32>
      %c0_24 = arith.constant 0 : index
      %c0_25 = arith.constant 0 : index
      %42 = vector.load %arg12[%c0_24, %c0_25] : memref<128x128xf32, #tpu.memory_space<vmem>>, vector<128x128xf32>
      tpu.vector_store %arg12[%c0_24, %c0_25], %41 {strides = array<i32>} : memref<128x128xf32, #tpu.memory_space<vmem>>, vector<128x128xf32>,
    } else {
    }
    %c0 = arith.constant 0 : index
    %c0_1 = arith.constant 0 : index
    %3 = vector.load %arg8[%c0, %c0_1] : memref<256x1xi32, #tpu.memory_space<vmem>>, vector<256x1xi32>
    %c0_2 = arith.constant 0 : index
    %c0_3 = arith.constant 0 : index
    %4 = vector.load %arg9[%c0_2, %c0_3] : memref<256x1xi32, #tpu.memory_space<vmem>>, vector<256x1xi32>
    %5 = tpu.iota {dimensions = array<i32: 1>} : vector<256x128xi32>
    %6 = vector.broadcast %3 : vector<256x1xi32> to vector<256x128xi32>
    %7 = arith.cmpi eq, %5, %6 : vector<256x128xi32>
    %8 = arith.extui %7 : vector<256x128xi1> to vector<256x128xi32>
    %9 = arith.sitofp %8 : vector<256x128xi32> to vector<256x128xf32>
    %10 = arith.truncf %9 : vector<256x128xf32> to vector<256x128xbf16>
    %11 = vector.broadcast %4 : vector<256x1xi32> to vector<256x128xi32>
    %12 = arith.cmpi eq, %5, %11 : vector<256x128xi32>
    %13 = arith.extui %12 : vector<256x128xi1> to vector<256x128xi32>
    %14 = arith.sitofp %13 : vector<256x128xi32> to vector<256x128xf32>
    %15 = arith.truncf %14 : vector<256x128xf32> to vector<256x128xbf16>
    %c0_4 = arith.constant 0 : index
    %c0_5 = arith.constant 0 : index
    %16 = vector.load %arg1[%c0_4, %c0_5] : memref<128x128xbf16, #tpu.memory_space<vmem>>, vector<128x128xbf16>
    %cst = arith.constant dense<0.000000e+00> : vector<256x128xf32>
    %17 = tpu.matmul %10, %16, %cst {dimension_numbers = #tpu.dot_dimension_numbers<[1], [0], [0], [1], [0, 0, 1, 1], [], []>} : vector<256x128xbf16>, vector<128x128xbf16>, vector<256x128xf32> -> vector<256x128xf32>
    %18 = arith.truncf %17 : vector<256x128xf32> to vector<256x128xbf16>
    %c0_6 = arith.constant 0 : index
    %c0_7 = arith.constant 0 : index
    %19 = vector.load %arg2[%c0_6, %c0_7] : memref<128x128xbf16, #tpu.memory_space<vmem>>, vector<128x128xbf16>
    %cst_8 = arith.constant dense<0.000000e+00> : vector<256x128xf32>
    %20 = tpu.matmul %15, %19, %cst_8 {dimension_numbers = #tpu.dot_dimension_numbers<[1], [0], [0], [1], [0, 0, 1, 1], [], []>} : vector<256x128xbf16>, vector<128x128xbf16>, vector<256x128xf32> -> vector<256x128xf32>
    %21 = arith.truncf %20 : vector<256x128xf32> to vector<256x128xbf16>
    %c0_9 = arith.constant 0 : index
    %c0_10 = arith.constant 0 : index
    %22 = vector.load %arg3[%c0_9, %c0_10] : memref<128x128xbf16, #tpu.memory_space<vmem>>, vector<128x128xbf16>
    %cst_11 = arith.constant dense<0.000000e+00> : vector<256x128xf32>
    %23 = tpu.matmul %15, %22, %cst_11 {dimension_numbers = #tpu.dot_dimension_numbers<[1], [0], [0], [1], [0, 0, 1, 1], [], []>} : vector<256x128xbf16>, vector<128x128xbf16>, vector<256x128xf32> -> vector<256x128xf32>
    %24 = arith.truncf %23 : vector<256x128xf32> to vector<256x128xbf16>
    %25 = arith.mulf %18, %21 : vector<256x128xbf16>
    %c0_12 = arith.constant 0 : index
    %c0_13 = arith.constant 0 : index
    %26 = vector.load %arg6[%c0_12, %c0_13] : memref<128x128xbf16, #tpu.memory_space<vmem>>, vector<128x128xbf16>
    %cst_14 = arith.constant dense<0.000000e+00> : vector<256x128xf32>
    %27 = tpu.matmul %25, %26, %cst_14 {dimension_numbers = #tpu.dot_dimension_numbers<[1], [0], [0], [1], [0, 0, 1, 1], [], []>} : vector<256x128xbf16>, vector<128x128xbf16>, vector<256x128xf32> -> vector<256x128xf32>
    %c0_15 = arith.constant 0 : index
    %c0_16 = arith.constant 0 : index
    %28 = vector.load %arg10[%c0_15, %c0_16] : memref<256x1xf32, #tpu.memory_space<vmem>>, vector<256x1xf32>
    %29 = vector.broadcast %28 : vector<256x1xf32> to vector<256x128xf32>
    %30 = arith.mulf %27, %29 : vector<256x128xf32>
    %31 = arith.extf %24 : vector<256x128xbf16> to vector<256x128xf32>
    %32 = arith.mulf %31, %30 : vector<256x128xf32>
    %33 = arith.truncf %32 : vector<256x128xf32> to vector<256x128xbf16>
    %c0_17 = arith.constant 0 : index
    %c0_18 = arith.constant 0 : index
    %34 = vector.load %arg12[%c0_17, %c0_18] : memref<128x128xf32, #tpu.memory_space<vmem>>, vector<128x128xf32>
    %cst_19 = arith.constant dense<0.000000e+00> : vector<128x128xf32>
    %35 = tpu.matmul %15, %33, %cst_19 {dimension_numbers = #tpu.dot_dimension_numbers<[0], [0], [1], [1], [0, 1, 1, 1], [], []>} : vector<256x128xbf16>, vector<256x128xbf16>, vector<128x128xf32> -> vector<128x128xf32>
    %36 = arith.addf %34, %35 : vector<128x128xf32>
    %c0_20 = arith.constant 0 : index
    %c0_21 = arith.constant 0 : index
    %37 = vector.load %arg12[%c0_20, %c0_21] : memref<128x128xf32, #tpu.memory_space<vmem>>, vector<128x128xf32>
    tpu.vector_store %arg12[%c0_20, %c0_21], %36 {strides = array<i32>} : memref<128x128xf32, #tpu.memory_space<vmem>>, vector<128x128xf32>,
    %c1_i32 = arith.constant 1 : i32
    %38 = arith.cmpi eq, %arg0, %c1_i32 : i32
    %39 = arith.extui %38 : i1 to i32
    %c0_i32_22 = arith.constant 0 : i32
    %40 = arith.cmpi ne, %39, %c0_i32_22 : i32
    scf.if %40 {
      %c0_23 = arith.constant 0 : index
      %c0_24 = arith.constant 0 : index
      %41 = vector.load %arg12[%c0_23, %c0_24] : memref<128x128xf32, #tpu.memory_space<vmem>>, vector<128x128xf32>
      %c0_25 = arith.constant 0 : index
      %c0_26 = arith.constant 0 : index
      %42 = vector.load %arg7[%c0_25, %c0_26] : memref<128x1xf32, #tpu.memory_space<vmem>>, vector<128x1xf32>
      %43 = vector.broadcast %42 : vector<128x1xf32> to vector<128x128xf32>
      %44 = arith.mulf %41, %43 : vector<128x128xf32>
      %45 = arith.truncf %44 : vector<128x128xf32> to vector<128x128xbf16>
      %c0_27 = arith.constant 0 : index
      %c0_28 = arith.constant 0 : index
      %46 = vector.load %arg4[%c0_27, %c0_28] : memref<128x128xbf16, #tpu.memory_space<vmem>>, vector<128x128xbf16>
      %cst_29 = arith.constant dense<0.000000e+00> : vector<128x128xf32>
      %47 = tpu.matmul %45, %46, %cst_29 {dimension_numbers = #tpu.dot_dimension_numbers<[1], [0], [0], [1], [0, 0, 1, 1], [], []>} : vector<128x128xbf16>, vector<128x128xbf16>, vector<128x128xf32> -> vector<128x128xf32>
      %c0_30 = arith.constant 0 : index
      %c0_31 = arith.constant 0 : index
      %48 = vector.load %arg5[%c0_30, %c0_31] : memref<1x128xf32, #tpu.memory_space<vmem>>, vector<1x128xf32>
      %49 = vector.broadcast %48 : vector<1x128xf32> to vector<128x128xf32>
      %50 = arith.addf %47, %49 : vector<128x128xf32>
      %c0_32 = arith.constant 0 : index
      %c0_33 = arith.constant 0 : index
      %51 = vector.load %arg11[%c0_32, %c0_33] : memref<128x128xf32, #tpu.memory_space<vmem>>, vector<128x128xf32>
      tpu.vector_store %arg11[%c0_32, %c0_33], %50 {strides = array<i32>} : memref<128x128xf32, #tpu.memory_space<vmem>>, vector<128x128xf32>,
    } else {
    }
    return
  }
  func.func @transform_0(%arg0: i32) -> (i32, i32) {
    %c0_i32 = arith.constant 0 : i32
    %c0_i32_0 = arith.constant 0 : i32
    %c0_i32_1 = arith.constant 0 : i32
    return %c0_i32, %c0_i32_0 : i32, i32
  }
  func.func @transform_1(%arg0: i32) -> (i32, i32) {
    %c0_i32 = arith.constant 0 : i32
    %c0_i32_0 = arith.constant 0 : i32
    %c0_i32_1 = arith.constant 0 : i32
    return %c0_i32, %c0_i32_0 : i32, i32
  }
  func.func @transform_2(%arg0: i32) -> (i32, i32) {
    %c0_i32 = arith.constant 0 : i32
    %c0_i32_0 = arith.constant 0 : i32
    %c0_i32_1 = arith.constant 0 : i32
    return %c0_i32, %c0_i32_0 : i32, i32
  }
  func.func @transform_3(%arg0: i32) -> (i32, i32) {
    %c0_i32 = arith.constant 0 : i32
    %c0_i32_0 = arith.constant 0 : i32
    %c0_i32_1 = arith.constant 0 : i32
    return %c0_i32, %c0_i32_0 : i32, i32
  }
  func.func @transform_4(%arg0: i32) -> (i32, i32) {
    %c0_i32 = arith.constant 0 : i32
    %c0_i32_0 = arith.constant 0 : i32
    %c0_i32_1 = arith.constant 0 : i32
    return %c0_i32, %c0_i32_0 : i32, i32
  }
  func.func @transform_5(%arg0: i32) -> (i32, i32) {
    %c0_i32 = arith.constant 0 : i32
    %c0_i32_0 = arith.constant 0 : i32
    %c0_i32_1 = arith.constant 0 : i32
    return %c0_i32, %c0_i32_0 : i32, i32
  }
  func.func @transform_6(%arg0: i32) -> (i32, i32) {
    %c0_i32 = arith.constant 0 : i32
    %c0_i32_0 = arith.constant 0 : i32
    %c0_i32_1 = arith.constant 0 : i32
    return %c0_i32, %c0_i32_0 : i32, i32
  }
  func.func @transform_7(%arg0: i32) -> (i32, i32) {
    %c0_i32 = arith.constant 0 : i32
    %c0_i32_0 = arith.constant 0 : i32
    return %arg0, %c0_i32 : i32, i32
  }
  func.func @transform_8(%arg0: i32) -> (i32, i32) {
    %c0_i32 = arith.constant 0 : i32
    %c0_i32_0 = arith.constant 0 : i32
    return %arg0, %c0_i32 : i32, i32
  }
  func.func @transform_9(%arg0: i32) -> (i32, i32) {
    %c0_i32 = arith.constant 0 : i32
    %c0_i32_0 = arith.constant 0 : i32
    return %arg0, %c0_i32 : i32, i32
  }
  func.func @transform_10(%arg0: i32) -> (i32, i32) {
    %c0_i32 = arith.constant 0 : i32
    %c0_i32_0 = arith.constant 0 : i32
    %c0_i32_1 = arith.constant 0 : i32
    return %c0_i32, %c0_i32_0 : i32, i32
  }
}

</mosaic_0001>

<llo_original>
// kernel: tpu_custom_call.1
$region0: #{tpu_custom_call.1}
  #allocation0 [shape = 'u32[]', space=smem, size = 0x4, offset = 0x4, fixed_abs, tag = 'smem constant byte address 0x4 - core index']
  #allocation1 [shape = 'u32[144,128]{1,0:T(1,128)}', space=vmem, size = 0x12000, scoped, tag = 'internal scratch']
  #allocation2 [shape = 'f32[128,128]{1,0:T(8,128)}', space=vmem, size = 0x10000, scoped, tag = 'scratch operand']
  %s0 = inlined_call_operand.vmem [shape: bf16[128,128], index: 0, kind: input, shape index: {}]
  %s1 = inlined_call_operand.vmem [shape: bf16[128,128], index: 1, kind: input, shape index: {}]
  %s2 = inlined_call_operand.vmem [shape: bf16[128,128], index: 2, kind: input, shape index: {}]
  %s3 = inlined_call_operand.vmem [shape: bf16[128,128], index: 3, kind: input, shape index: {}]
  %s4 = inlined_call_operand.vmem [shape: f32[1,128], index: 4, kind: input, shape index: {}]
  %s5 = inlined_call_operand.vmem [shape: bf16[128,128], index: 5, kind: input, shape index: {}]
  %s6 = inlined_call_operand.vmem [shape: f32[128,1], index: 6, kind: input, shape index: {}]
  %s7 = inlined_call_operand.vmem [shape: s32[512,1], index: 7, kind: input, shape index: {}]
  %s8 = inlined_call_operand.vmem [shape: s32[512,1], index: 8, kind: input, shape index: {}]
  %s9 = inlined_call_operand.vmem [shape: f32[512,1], index: 9, kind: input, shape index: {}]
  %s10 = inlined_call_operand.hbm [shape: f32[128,128], index: 10, kind: output, shape index: {}]
  %s11 = sld [smem:[#allocation0]]
  $region81: #{tpu_custom_call.1} parent=0
    _
  %s13 = ssub.s32 1, %s11
  %s14 = scalar_select 0, %s13, %s11
  $region1: #{tpu_custom_call.1} parent=0
    #allocation3 [shape = 'u8[65536]{0}', space=vmem, size = 0x10000, scoped, tag = 'output window, operand 0, single buffered']
    #allocation4 [shape = 's32[2]{0}', space=sflag, size = 0x8, scoped, tag = 'scoped memory for tpu_custom_call.1']
    %15 = vsyncpa [#allocation4], 0
    loop: start=0, step=1, limit=4
    $region2: #{tpu_custom_call.1} parent=1 // loop_pre_header
      _
    $region3: #{tpu_custom_call.1} parent=1 // loop_header
      %s17 = sphi 0, %s21
      %p18 = scmp.ge.s32.totalorder %s17, 4
      %s25 = sphi 0, %s25
      %s27 = sphi 0, %s25
      %s28 = sphi 0, %s27
      %s42 = sphi 0, %s28
      %s46 = sphi 0, %s46
      %s48 = sphi 0, %s46
      %s49 = sphi 0, %s48
      %s63 = sphi 0, %s49
      %s67 = sphi 0, %s67
      %s69 = sphi 0, %s67
      %s70 = sphi 0, %s69
      %s84 = sphi 0, %s70
      %s88 = sphi 0, %s88
      %s90 = sphi 0, %s88
      %s91 = sphi 0, %s90
      %s105 = sphi 0, %s91
      %s109 = sphi 0, %s109
      %s111 = sphi 0, %s109
      %s112 = sphi 0, %s111
      %s126 = sphi 0, %s112
      %s130 = sphi 0, %s130
      %s132 = sphi 0, %s130
      %s133 = sphi 0, %s132
      %s147 = sphi 0, %s133
      %s151 = sphi 0, %s151
      %s153 = sphi 0, %s151
      %s154 = sphi 0, %s153
      %s168 = sphi 0, %s154
      %s174 = sphi 0, %s176
      %s177 = sphi 0, %s174
      %s178 = sphi 0, %s177
      %s194 = sphi 0, %s178
      %s200 = sphi 0, %s202
      %s203 = sphi 0, %s200
      %s204 = sphi 0, %s203
      %s220 = sphi 0, %s204
      %s226 = sphi 0, %s228
      %s229 = sphi 0, %s226
      %s230 = sphi 0, %s229
      %s246 = sphi 0, %s230
      %s250 = sphi 0, %s250
      %s252 = sphi 0, %s250
      %s253 = sphi 0, %s252
      %s267 = sphi 0, %s253
    $region4: #{tpu_custom_call.1} parent=1 // loop_header_branch
      %20 = sbr.rel (%p18) target = $region8
    $region5: #{tpu_custom_call.1} parent=1 // loop_body
      %s22 = ssub.s32 %s17, 1
      %s23 = ssub.s32 %s17, 2
      %s24 = sadd.s32 %s17, 1
      %s26 = sadd.s32 %s25, 1
      %p29 = scmp.eq.s32.totalorder %s17, 1
      %p30 = scmp.ne.s32.totalorder %s25, %s27
      %p31 = scmp.eq.s32.totalorder %s17, 0
      %p32 = por %p30, %p31
      %p33 = scmp.ne.s32.totalorder %s25, %s27
      %p34 = scmp.eq.s32.totalorder %s22, 1
      %p35 = por %p33, %p34
      %p36 = scmp.ne.s32.totalorder %s27, %s28
      %p37 = scmp.eq.s32.totalorder %s22, 0
      %p38 = por %p36, %p37
      %p39 = scmp.ne.s32.totalorder %s27, %s28
      %p40 = scmp.eq.s32.totalorder %s23, 1
      %p41 = por %p39, %p40
      %p43 = scmp.ne.s32.totalorder %s28, %s42
      %p44 = scmp.eq.s32.totalorder %s23, 0
      %p45 = por %p43, %p44
      %s47 = sadd.s32 %s46, 1
      %p50 = scmp.eq.s32.totalorder %s17, 1
      %p51 = scmp.ne.s32.totalorder %s46, %s48
      %p52 = scmp.eq.s32.totalorder %s17, 0
      %p53 = por %p51, %p52
      %p54 = scmp.ne.s32.totalorder %s46, %s48
      %p55 = scmp.eq.s32.totalorder %s22, 1
      %p56 = por %p54, %p55
      %p57 = scmp.ne.s32.totalorder %s48, %s49
      %p58 = scmp.eq.s32.totalorder %s22, 0
      %p59 = por %p57, %p58
      %p60 = scmp.ne.s32.totalorder %s48, %s49
      %p61 = scmp.eq.s32.totalorder %s23, 1
      %p62 = por %p60, %p61
      %p64 = scmp.ne.s32.totalorder %s49, %s63
      %p65 = scmp.eq.s32.totalorder %s23, 0
      %p66 = por %p64, %p65
      %s68 = sadd.s32 %s67, 1
      %p71 = scmp.eq.s32.totalorder %s17, 1
      %p72 = scmp.ne.s32.totalorder %s67, %s69
      %p73 = scmp.eq.s32.totalorder %s17, 0
      %p74 = por %p72, %p73
      %p75 = scmp.ne.s32.totalorder %s67, %s69
      %p76 = scmp.eq.s32.totalorder %s22, 1
      %p77 = por %p75, %p76
      %p78 = scmp.ne.s32.totalorder %s69, %s70
      %p79 = scmp.eq.s32.totalorder %s22, 0
      %p80 = por %p78, %p79
      %p81 = scmp.ne.s32.totalorder %s69, %s70
      %p82 = scmp.eq.s32.totalorder %s23, 1
      %p83 = por %p81, %p82
      %p85 = scmp.ne.s32.totalorder %s70, %s84
      %p86 = scmp.eq.s32.totalorder %s23, 0
      %p87 = por %p85, %p86
      %s89 = sadd.s32 %s88, 1
      %p92 = scmp.eq.s32.totalorder %s17, 1
      %p93 = scmp.ne.s32.totalorder %s88, %s90
      %p94 = scmp.eq.s32.totalorder %s17, 0
      %p95 = por %p93, %p94
      %p96 = scmp.ne.s32.totalorder %s88, %s90
      %p97 = scmp.eq.s32.totalorder %s22, 1
      %p98 = por %p96, %p97
      %p99 = scmp.ne.s32.totalorder %s90, %s91
      %p100 = scmp.eq.s32.totalorder %s22, 0
      %p101 = por %p99, %p100
      %p102 = scmp.ne.s32.totalorder %s90, %s91
      %p103 = scmp.eq.s32.totalorder %s23, 1
      %p104 = por %p102, %p103
      %p106 = scmp.ne.s32.totalorder %s91, %s105
      %p107 = scmp.eq.s32.totalorder %s23, 0
      %p108 = por %p106, %p107
      %s110 = sadd.s32 %s109, 1
      %p113 = scmp.eq.s32.totalorder %s17, 1
      %p114 = scmp.ne.s32.totalorder %s109, %s111
      %p115 = scmp.eq.s32.totalorder %s17, 0
      %p116 = por %p114, %p115
      %p117 = scmp.ne.s32.totalorder %s109, %s111
      %p118 = scmp.eq.s32.totalorder %s22, 1
      %p119 = por %p117, %p118
      %p120 = scmp.ne.s32.totalorder %s111, %s112
      %p121 = scmp.eq.s32.totalorder %s22, 0
      %p122 = por %p120, %p121
      %p123 = scmp.ne.s32.totalorder %s111, %s112
      %p124 = scmp.eq.s32.totalorder %s23, 1
      %p125 = por %p123, %p124
      %p127 = scmp.ne.s32.totalorder %s112, %s126
      %p128 = scmp.eq.s32.totalorder %s23, 0
      %p129 = por %p127, %p128
      %s131 = sadd.s32 %s130, 1
      %p134 = scmp.eq.s32.totalorder %s17, 1
      %p135 = scmp.ne.s32.totalorder %s130, %s132
      %p136 = scmp.eq.s32.totalorder %s17, 0
      %p137 = por %p135, %p136
      %p138 = scmp.ne.s32.totalorder %s130, %s132
      %p139 = scmp.eq.s32.totalorder %s22, 1
      %p140 = por %p138, %p139
      %p141 = scmp.ne.s32.totalorder %s132, %s133
      %p142 = scmp.eq.s32.totalorder %s22, 0
      %p143 = por %p141, %p142
      %p144 = scmp.ne.s32.totalorder %s132, %s133
      %p145 = scmp.eq.s32.totalorder %s23, 1
      %p146 = por %p144, %p145
      %p148 = scmp.ne.s32.totalorder %s133, %s147
      %p149 = scmp.eq.s32.totalorder %s23, 0
      %p150 = por %p148, %p149
      %s152 = sadd.s32 %s151, 1
      %p155 = scmp.eq.s32.totalorder %s17, 1
      %p156 = scmp.ne.s32.totalorder %s151, %s153
      %p157 = scmp.eq.s32.totalorder %s17, 0
      %p158 = por %p156, %p157
      %p159 = scmp.ne.s32.totalorder %s151, %s153
      %p160 = scmp.eq.s32.totalorder %s22, 1
      %p161 = por %p159, %p160
      %p162 = scmp.ne.s32.totalorder %s153, %s154
      %p163 = scmp.eq.s32.totalorder %s22, 0
      %p164 = por %p162, %p163
      %p165 = scmp.ne.s32.totalorder %s153, %s154
      %p166 = scmp.eq.s32.totalorder %s23, 1
      %p167 = por %p165, %p166
      %p169 = scmp.ne.s32.totalorder %s154, %s168
      %p170 = scmp.eq.s32.totalorder %s23, 0
      %p171 = por %p169, %p170
      %s172 = ssub.s32 %s17, %s24
      %p173 = scmp.eq.s32.totalorder %s172, 0
      %s175 = sadd.s32 %s174, 1
      %s176 = scalar_select %p173, %s174, %s175
      %p179 = pneg %p173
      %p180 = scmp.eq.s32.totalorder %s17, 1
      %p181 = por %p179, %p180
      %p182 = scmp.ne.s32.totalorder %s174, %s177
      %p183 = scmp.eq.s32.totalorder %s17, 0
      %p184 = por %p182, %p183
      %p185 = scmp.ne.s32.totalorder %s174, %s177
      %p186 = scmp.eq.s32.totalorder %s22, 1
      %p187 = por %p185, %p186
      %p188 = scmp.ne.s32.totalorder %s177, %s178
      %p189 = scmp.eq.s32.totalorder %s22, 0
      %p190 = por %p188, %p189
      %p191 = scmp.ne.s32.totalorder %s177, %s178
      %p192 = scmp.eq.s32.totalorder %s23, 1
      %p193 = por %p191, %p192
      %p195 = scmp.ne.s32.totalorder %s178, %s194
      %p196 = scmp.eq.s32.totalorder %s23, 0
      %p197 = por %p195, %p196
      %s198 = ssub.s32 %s17, %s24
      %p199 = scmp.eq.s32.totalorder %s198, 0
      %s201 = sadd.s32 %s200, 1
      %s202 = scalar_select %p199, %s200, %s201
      %p205 = pneg %p199
      %p206 = scmp.eq.s32.totalorder %s17, 1
      %p207 = por %p205, %p206
      %p208 = scmp.ne.s32.totalorder %s200, %s203
      %p209 = scmp.eq.s32.totalorder %s17, 0
      %p210 = por %p208, %p209
      %p211 = scmp.ne.s32.totalorder %s200, %s203
      %p212 = scmp.eq.s32.totalorder %s22, 1
      %p213 = por %p211, %p212
      %p214 = scmp.ne.s32.totalorder %s203, %s204
      %p215 = scmp.eq.s32.totalorder %s22, 0
      %p216 = por %p214, %p215
      %p217 = scmp.ne.s32.totalorder %s203, %s204
      %p218 = scmp.eq.s32.totalorder %s23, 1
      %p219 = por %p217, %p218
      %p221 = scmp.ne.s32.totalorder %s204, %s220
      %p222 = scmp.eq.s32.totalorder %s23, 0
      %p223 = por %p221, %p222
      %s224 = ssub.s32 %s17, %s24
      %p225 = scmp.eq.s32.totalorder %s224, 0
      %s227 = sadd.s32 %s226, 1
      %s228 = scalar_select %p225, %s226, %s227
      %p231 = pneg %p225
      %p232 = scmp.eq.s32.totalorder %s17, 1
      %p233 = por %p231, %p232
      %p234 = scmp.ne.s32.totalorder %s226, %s229
      %p235 = scmp.eq.s32.totalorder %s17, 0
      %p236 = por %p234, %p235
      %p237 = scmp.ne.s32.totalorder %s226, %s229
      %p238 = scmp.eq.s32.totalorder %s22, 1
      %p239 = por %p237, %p238
      %p240 = scmp.ne.s32.totalorder %s229, %s230
      %p241 = scmp.eq.s32.totalorder %s22, 0
      %p242 = por %p240, %p241
      %p243 = scmp.ne.s32.totalorder %s229, %s230
      %p244 = scmp.eq.s32.totalorder %s23, 1
      %p245 = por %p243, %p244
      %p247 = scmp.ne.s32.totalorder %s230, %s246
      %p248 = scmp.eq.s32.totalorder %s23, 0
      %p249 = por %p247, %p248
      %s251 = sadd.s32 %s250, 1
      %p254 = scmp.eq.s32.totalorder %s17, 1
      %p255 = scmp.ne.s32.totalorder %s250, %s252
      %p256 = scmp.eq.s32.totalorder %s17, 0
      %p257 = por %p255, %p256
      %p258 = scmp.ne.s32.totalorder %s250, %s252
      %p259 = scmp.eq.s32.totalorder %s22, 1
      %p260 = por %p258, %p259
      %p261 = scmp.ne.s32.totalorder %s252, %s253
      %p262 = scmp.eq.s32.totalorder %s22, 0
      %p263 = por %p261, %p262
      %p264 = scmp.ne.s32.totalorder %s252, %s253
      %p265 = scmp.eq.s32.totalorder %s23, 1
      %p266 = por %p264, %p265
      %p268 = scmp.ne.s32.totalorder %s253, %s267
      %p269 = scmp.eq.s32.totalorder %s23, 0
      %p270 = por %p268, %p269
      %p271 = scmp.le.s32.totalorder 1, %s17
      %p272 = scmp.lt.s32.totalorder %s17, 3
      %p273 = pnand %p271, %p272
      %p274 = pneg %p273
      // Predicated region
      $region9: #{tpu_custom_call.1} parent=5 // pred_check
        _
      $region10: #{tpu_custom_call.1} parent=5 // pred_check_branch
        %276 = sbr.rel (%p273) target = $region12
      $region11: #{tpu_custom_call.1} parent=5 // pred_region
        %s277 = ssub.s32 %s17, 1
        // Predicated region
        $region13: #{tpu_custom_call.1} parent=11 // pred_check
          %p278 = pneg %p38
        $region14: #{tpu_custom_call.1} parent=11 // pred_check_branch
          %280 = sbr.rel (%p278) target = $region16
        $region15: #{tpu_custom_call.1} parent=11 // pred_region
          _
        $region16: #{tpu_custom_call.1} parent=11 // pred_fallthru
          _
        // Predicated region
        $region17: #{tpu_custom_call.1} parent=11 // pred_check
          %p281 = pneg %p59
        $region18: #{tpu_custom_call.1} parent=11 // pred_check_branch
          %283 = sbr.rel (%p281) target = $region20
        $region19: #{tpu_custom_call.1} parent=11 // pred_region
          _
        $region20: #{tpu_custom_call.1} parent=11 // pred_fallthru
          _
        // Predicated region
        $region21: #{tpu_custom_call.1} parent=11 // pred_check
          %p284 = pneg %p80
        $region22: #{tpu_custom_call.1} parent=11 // pred_check_branch
          %286 = sbr.rel (%p284) target = $region24
        $region23: #{tpu_custom_call.1} parent=11 // pred_region
          _
        $region24: #{tpu_custom_call.1} parent=11 // pred_fallthru
          _
        // Predicated region
        $region25: #{tpu_custom_call.1} parent=11 // pred_check
          %p287 = pneg %p101
        $region26: #{tpu_custom_call.1} parent=11 // pred_check_branch
          %289 = sbr.rel (%p287) target = $region28
        $region27: #{tpu_custom_call.1} parent=11 // pred_region
          _
        $region28: #{tpu_custom_call.1} parent=11 // pred_fallthru
          _
        // Predicated region
        $region29: #{tpu_custom_call.1} parent=11 // pred_check
          %p290 = pneg %p122
        $region30: #{tpu_custom_call.1} parent=11 // pred_check_branch
          %292 = sbr.rel (%p290) target = $region32
        $region31: #{tpu_custom_call.1} parent=11 // pred_region
          _
        $region32: #{tpu_custom_call.1} parent=11 // pred_fallthru
          _
        // Predicated region
        $region33: #{tpu_custom_call.1} parent=11 // pred_check
          %p293 = pneg %p143
        $region34: #{tpu_custom_call.1} parent=11 // pred_check_branch
          %295 = sbr.rel (%p293) target = $region36
        $region35: #{tpu_custom_call.1} parent=11 // pred_region
          _
        $region36: #{tpu_custom_call.1} parent=11 // pred_fallthru
          _
        // Predicated region
        $region37: #{tpu_custom_call.1} parent=11 // pred_check
          %p296 = pneg %p164
        $region38: #{tpu_custom_call.1} parent=11 // pred_check_branch
          %298 = sbr.rel (%p296) target = $region40
        $region39: #{tpu_custom_call.1} parent=11 // pred_region
          _
        $region40: #{tpu_custom_call.1} parent=11 // pred_fallthru
          _
      $region12: #{tpu_custom_call.1} parent=5 // pred_fallthru
        _
      %p299 = scmp.lt.s32.totalorder %s17, 2
      // Predicated region
      $region41: #{tpu_custom_call.1} parent=5 // pred_check
        %p300 = pneg %p299
      $region42: #{tpu_custom_call.1} parent=5 // pred_check_branch
        %302 = sbr.rel (%p300) target = $region44
      $region43: #{tpu_custom_call.1} parent=5 // pred_region
        // Predicated region
        $region45: #{tpu_custom_call.1} parent=43 // pred_check
          %p303 = pneg %p184
        $region46: #{tpu_custom_call.1} parent=43 // pred_check_branch
          %305 = sbr.rel (%p303) target = $region48
        $region47: #{tpu_custom_call.1} parent=43 // pred_region
          %s306 = smul.u32 32, %s17
          %p307 = scmp.lt.s32.totalorder %s306, 63
          %s308 = scalar_select %p307, %s306, 63
          %s309 = smul.addr %s308, 8
          %s310 = scalar_lea.vmem %s7, %s309
          %s311 = smul.u32 32, %s17
        $region48: #{tpu_custom_call.1} parent=43 // pred_fallthru
          _
        // Predicated region
        $region49: #{tpu_custom_call.1} parent=43 // pred_check
          %p312 = pneg %p210
        $region50: #{tpu_custom_call.1} parent=43 // pred_check_branch
          %314 = sbr.rel (%p312) target = $region52
        $region51: #{tpu_custom_call.1} parent=43 // pred_region
          %s315 = smul.u32 32, %s17
          %p316 = scmp.lt.s32.totalorder %s315, 63
          %s317 = scalar_select %p316, %s315, 63
          %s318 = smul.addr %s317, 8
          %s319 = scalar_lea.vmem %s8, %s318
          %s320 = smul.u32 32, %s17
        $region52: #{tpu_custom_call.1} parent=43 // pred_fallthru
          _
        // Predicated region
        $region53: #{tpu_custom_call.1} parent=43 // pred_check
          %p321 = pneg %p236
        $region54: #{tpu_custom_call.1} parent=43 // pred_check_branch
          %323 = sbr.rel (%p321) target = $region56
        $region55: #{tpu_custom_call.1} parent=43 // pred_region
          %s324 = smul.u32 32, %s17
          %p325 = scmp.lt.s32.totalorder %s324, 63
          %s326 = scalar_select %p325, %s324, 63
          %s327 = smul.addr %s326, 8
          %s328 = scalar_lea.vmem %s9, %s327
          %s329 = smul.u32 32, %s17
        $region56: #{tpu_custom_call.1} parent=43 // pred_fallthru
          _
      $region44: #{tpu_custom_call.1} parent=5 // pred_fallthru
        _
      %p330 = scmp.le.s32.totalorder 1, %s17
      %p331 = scmp.lt.s32.totalorder %s17, 3
      %p332 = pnand %p330, %p331
      %p333 = pneg %p332
      // Predicated region
      $region57: #{tpu_custom_call.1} parent=5 // pred_check
        _
      $region58: #{tpu_custom_call.1} parent=5 // pred_check_branch
        %335 = sbr.rel (%p332) target = $region60
      $region59: #{tpu_custom_call.1} parent=5 // pred_region
        %s336 = ssub.s32 %s17, 1
        %p337 = pneg %p38
        %p338 = pneg %p35
        %p339 = pneg %p59
        %p340 = pneg %p56
        %p341 = pneg %p80
        %p342 = pneg %p77
        %p343 = pneg %p101
        %p344 = pneg %p98
        %p345 = pneg %p122
        %p346 = pneg %p119
        %p347 = pneg %p143
        %p348 = pneg %p140
        %p349 = pneg %p164
        %p350 = pneg %p161
        %s351 = smul.u32 32, %s22
        %p352 = scmp.lt.s32.totalorder %s351, 63
        %s353 = scalar_select %p352, %s351, 63
        %s354 = smul.addr %s353, 8
        %s355 = scalar_lea.vmem %s7, %s354
        %p356 = pneg %p190
        %p357 = pneg %p187
        %s358 = smul.u32 32, %s22
        %p359 = scmp.lt.s32.totalorder %s358, 63
        %s360 = scalar_select %p359, %s358, 63
        %s361 = smul.addr %s360, 8
        %s362 = scalar_lea.vmem %s8, %s361
        %p363 = pneg %p216
        %p364 = pneg %p213
        %s365 = smul.u32 32, %s22
        %p366 = scmp.lt.s32.totalorder %s365, 63
        %s367 = scalar_select %p366, %s365, 63
        %s368 = smul.addr %s367, 8
        %s369 = scalar_lea.vmem %s9, %s368
        %p370 = pneg %p242
        %p371 = pneg %p239
        %p372 = pneg %p263
        %p373 = pneg %p260
        %s374 = smul.u32 32, %s22
        %p375 = scmp.lt.s32.totalorder %s374, 63
        %s376 = scalar_select %p375, %s374, 63
        %s377 = smul.addr %s376, 8
        %s378 = scalar_lea.vmem %s7, %s377
        %s379 = smul.u32 32, %s22
        %s380 = smul.u32 32, %s22
        %p381 = scmp.lt.s32.totalorder %s380, 63
        %s382 = scalar_select %p381, %s380, 63
        %s383 = smul.addr %s382, 8
        %s384 = scalar_lea.vmem %s8, %s383
        %s385 = smul.u32 32, %s22
        %s386 = smul.u32 32, %s22
        %p387 = scmp.lt.s32.totalorder %s386, 63
        %s388 = scalar_select %p387, %s386, 63
        %s389 = smul.addr %s388, 8
        %s390 = scalar_lea.vmem %s9, %s389
        %s391 = smul.u32 32, %s22
        %p393 = scmp.eq.s32.totalorder %s22, 0
        // Predicated region
        $region61: #{tpu_custom_call.1} parent=59 // pred_check
          %p394 = pneg %p393
        $region62: #{tpu_custom_call.1} parent=59 // pred_check_branch
          %396 = sbr.rel (%p394) target = $region64
        $region63: #{tpu_custom_call.1} parent=59 // pred_region
          %397 = vst [vmem:[#allocation2] sm:$0xff] 0.0
          %398 = vst [vmem:[#allocation2 + $0x8] sm:$0xff] 0.0
          %399 = vst [vmem:[#allocation2 + $0x10] sm:$0xff] 0.0
          %400 = vst [vmem:[#allocation2 + $0x18] sm:$0xff] 0.0
          %401 = vst [vmem:[#allocation2 + $0x20] sm:$0xff] 0.0
          %402 = vst [vmem:[#allocation2 + $0x28] sm:$0xff] 0.0
          %403 = vst [vmem:[#allocation2 + $0x30] sm:$0xff] 0.0
          %404 = vst [vmem:[#allocation2 + $0x38] sm:$0xff] 0.0
          %405 = vst [vmem:[#allocation2 + $0x40] sm:$0xff] 0.0
          %406 = vst [vmem:[#allocation2 + $0x48] sm:$0xff] 0.0
          %407 = vst [vmem:[#allocation2 + $0x50] sm:$0xff] 0.0
          %408 = vst [vmem:[#allocation2 + $0x58] sm:$0xff] 0.0
          %409 = vst [vmem:[#allocation2 + $0x60] sm:$0xff] 0.0
          %410 = vst [vmem:[#allocation2 + $0x68] sm:$0xff] 0.0
          %411 = vst [vmem:[#allocation2 + $0x70] sm:$0xff] 0.0
          %412 = vst [vmem:[#allocation2 + $0x78] sm:$0xff] 0.0
        $region64: #{tpu_custom_call.1} parent=59 // pred_fallthru
          _
        %v413 = vld [vmem:[%s378] sm:$0xff]
        %v414 = vld [vmem:[%s378 + $0x8] sm:$0xff]
        %v415 = vld [vmem:[%s378 + $0x10] sm:$0xff]
        %v416 = vld [vmem:[%s378 + $0x18] sm:$0xff]
        %v417 = vld [vmem:[%s378 + $0x20] sm:$0xff]
        %v418 = vld [vmem:[%s378 + $0x28] sm:$0xff]
        %v419 = vld [vmem:[%s378 + $0x30] sm:$0xff]
        %v420 = vld [vmem:[%s378 + $0x38] sm:$0xff]
        %v421 = vld [vmem:[%s378 + $0x40] sm:$0xff]
        %v422 = vld [vmem:[%s378 + $0x48] sm:$0xff]
        %v423 = vld [vmem:[%s378 + $0x50] sm:$0xff]
        %v424 = vld [vmem:[%s378 + $0x58] sm:$0xff]
        %v425 = vld [vmem:[%s378 + $0x60] sm:$0xff]
        %v426 = vld [vmem:[%s378 + $0x68] sm:$0xff]
        %v427 = vld [vmem:[%s378 + $0x70] sm:$0xff]
        %v428 = vld [vmem:[%s378 + $0x78] sm:$0xff]
        %v429 = vld [vmem:[%s378 + $0x80] sm:$0xff]
        %v430 = vld [vmem:[%s378 + $0x88] sm:$0xff]
        %v431 = vld [vmem:[%s378 + $0x90] sm:$0xff]
        %v432 = vld [vmem:[%s378 + $0x98] sm:$0xff]
        %v433 = vld [vmem:[%s378 + $0xa0] sm:$0xff]
        %v434 = vld [vmem:[%s378 + $0xa8] sm:$0xff]
        %v435 = vld [vmem:[%s378 + $0xb0] sm:$0xff]
        %v436 = vld [vmem:[%s378 + $0xb8] sm:$0xff]
        %v437 = vld [vmem:[%s378 + $0xc0] sm:$0xff]
        %v438 = vld [vmem:[%s378 + $0xc8] sm:$0xff]
        %v439 = vld [vmem:[%s378 + $0xd0] sm:$0xff]
        %v440 = vld [vmem:[%s378 + $0xd8] sm:$0xff]
        %v441 = vld [vmem:[%s378 + $0xe0] sm:$0xff]
        %v442 = vld [vmem:[%s378 + $0xe8] sm:$0xff]
        %v443 = vld [vmem:[%s378 + $0xf0] sm:$0xff]
        %v444 = vld [vmem:[%s378 + $0xf8] sm:$0xff]
        %v445 = vld [vmem:[%s384] sm:$0xff]
        %v446 = vld [vmem:[%s384 + $0x8] sm:$0xff]
        %v447 = vld [vmem:[%s384 + $0x10] sm:$0xff]
        %v448 = vld [vmem:[%s384 + $0x18] sm:$0xff]
        %v449 = vld [vmem:[%s384 + $0x20] sm:$0xff]
        %v450 = vld [vmem:[%s384 + $0x28] sm:$0xff]
        %v451 = vld [vmem:[%s384 + $0x30] sm:$0xff]
        %v452 = vld [vmem:[%s384 + $0x38] sm:$0xff]
        %v453 = vld [vmem:[%s384 + $0x40] sm:$0xff]
        %v454 = vld [vmem:[%s384 + $0x48] sm:$0xff]
        %v455 = vld [vmem:[%s384 + $0x50] sm:$0xff]
        %v456 = vld [vmem:[%s384 + $0x58] sm:$0xff]
        %v457 = vld [vmem:[%s384 + $0x60] sm:$0xff]
        %v458 = vld [vmem:[%s384 + $0x68] sm:$0xff]
        %v459 = vld [vmem:[%s384 + $0x70] sm:$0xff]
        %v460 = vld [vmem:[%s384 + $0x78] sm:$0xff]
        %v461 = vld [vmem:[%s384 + $0x80] sm:$0xff]
        %v462 = vld [vmem:[%s384 + $0x88] sm:$0xff]
        %v463 = vld [vmem:[%s384 + $0x90] sm:$0xff]
        %v464 = vld [vmem:[%s384 + $0x98] sm:$0xff]
        %v465 = vld [vmem:[%s384 + $0xa0] sm:$0xff]
        %v466 = vld [vmem:[%s384 + $0xa8] sm:$0xff]
        %v467 = vld [vmem:[%s384 + $0xb0] sm:$0xff]
        %v468 = vld [vmem:[%s384 + $0xb8] sm:$0xff]
        %v469 = vld [vmem:[%s384 + $0xc0] sm:$0xff]
        %v470 = vld [vmem:[%s384 + $0xc8] sm:$0xff]
        %v471 = vld [vmem:[%s384 + $0xd0] sm:$0xff]
        %v472 = vld [vmem:[%s384 + $0xd8] sm:$0xff]
        %v473 = vld [vmem:[%s384 + $0xe0] sm:$0xff]
        %v474 = vld [vmem:[%s384 + $0xe8] sm:$0xff]
        %v475 = vld [vmem:[%s384 + $0xf0] sm:$0xff]
        %v476 = vld [vmem:[%s384 + $0xf8] sm:$0xff]
        %v477 = vlaneseq
        %v478 = vand.u32 %v477, 127
        %479 = vset.pattern.permute.xlu0 0
        %480 = vperm.xlu0 %479, %v413
        %v481 = vpop.permute.xlu0 %480
        %482 = vset.pattern.permute.xlu0 0
        %483 = vperm.xlu0 %482, %v414
        %v484 = vpop.permute.xlu0 %483
        %485 = vset.pattern.permute.xlu0 0
        %486 = vperm.xlu0 %485, %v415
        %v487 = vpop.permute.xlu0 %486
        %488 = vset.pattern.permute.xlu0 0
        %489 = vperm.xlu0 %488, %v416
        %v490 = vpop.permute.xlu0 %489
        %491 = vset.pattern.permute.xlu0 0
        %492 = vperm.xlu0 %491, %v417
        %v493 = vpop.permute.xlu0 %492
        %494 = vset.pattern.permute.xlu0 0
        %495 = vperm.xlu0 %494, %v418
        %v496 = vpop.permute.xlu0 %495
        %497 = vset.pattern.permute.xlu0 0
        %498 = vperm.xlu0 %497, %v419
        %v499 = vpop.permute.xlu0 %498
        %500 = vset.pattern.permute.xlu0 0
        %501 = vperm.xlu0 %500, %v420
        %v502 = vpop.permute.xlu0 %501
        %503 = vset.pattern.permute.xlu0 0
        %504 = vperm.xlu0 %503, %v421
        %v505 = vpop.permute.xlu0 %504
        %506 = vset.pattern.permute.xlu0 0
        %507 = vperm.xlu0 %506, %v422
        %v508 = vpop.permute.xlu0 %507
        %509 = vset.pattern.permute.xlu0 0
        %510 = vperm.xlu0 %509, %v423
        %v511 = vpop.permute.xlu0 %510
        %512 = vset.pattern.permute.xlu0 0
        %513 = vperm.xlu0 %512, %v424
        %v514 = vpop.permute.xlu0 %513
        %515 = vset.pattern.permute.xlu0 0
        %516 = vperm.xlu0 %515, %v425
        %v517 = vpop.permute.xlu0 %516
        %518 = vset.pattern.permute.xlu0 0
        %519 = vperm.xlu0 %518, %v426
        %v520 = vpop.permute.xlu0 %519
        %521 = vset.pattern.permute.xlu0 0
        %522 = vperm.xlu0 %521, %v427
        %v523 = vpop.permute.xlu0 %522
        %524 = vset.pattern.permute.xlu0 0
        %525 = vperm.xlu0 %524, %v428
        %v526 = vpop.permute.xlu0 %525
        %527 = vset.pattern.permute.xlu0 0
        %528 = vperm.xlu0 %527, %v429
        %v529 = vpop.permute.xlu0 %528
        %530 = vset.pattern.permute.xlu0 0
        %531 = vperm.xlu0 %530, %v430
        %v532 = vpop.permute.xlu0 %531
        %533 = vset.pattern.permute.xlu0 0
        %534 = vperm.xlu0 %533, %v431
        %v535 = vpop.permute.xlu0 %534
        %536 = vset.pattern.permute.xlu0 0
        %537 = vperm.xlu0 %536, %v432
        %v538 = vpop.permute.xlu0 %537
        %539 = vset.pattern.permute.xlu0 0
        %540 = vperm.xlu0 %539, %v433
        %v541 = vpop.permute.xlu0 %540
        %542 = vset.pattern.permute.xlu0 0
        %543 = vperm.xlu0 %542, %v434
        %v544 = vpop.permute.xlu0 %543
        %545 = vset.pattern.permute.xlu0 0
        %546 = vperm.xlu0 %545, %v435
        %v547 = vpop.permute.xlu0 %546
        %548 = vset.pattern.permute.xlu0 0
        %549 = vperm.xlu0 %548, %v436
        %v550 = vpop.permute.xlu0 %549
        %551 = vset.pattern.permute.xlu0 0
        %552 = vperm.xlu0 %551, %v437
        %v553 = vpop.permute.xlu0 %552
        %554 = vset.pattern.permute.xlu0 0
        %555 = vperm.xlu0 %554, %v438
        %v556 = vpop.permute.xlu0 %555
        %557 = vset.pattern.permute.xlu0 0
        %558 = vperm.xlu0 %557, %v439
        %v559 = vpop.permute.xlu0 %558
        %560 = vset.pattern.permute.xlu0 0
        %561 = vperm.xlu0 %560, %v440
        %v562 = vpop.permute.xlu0 %561
        %563 = vset.pattern.permute.xlu0 0
        %564 = vperm.xlu0 %563, %v441
        %v565 = vpop.permute.xlu0 %564
        %566 = vset.pattern.permute.xlu0 0
        %567 = vperm.xlu0 %566, %v442
        %v568 = vpop.permute.xlu0 %567
        %569 = vset.pattern.permute.xlu0 0
        %570 = vperm.xlu0 %569, %v443
        %v571 = vpop.permute.xlu0 %570
        %572 = vset.pattern.permute.xlu0 0
        %573 = vperm.xlu0 %572, %v444
        %v574 = vpop.permute.xlu0 %573
        %vm575 = vcmp.eq.s32.totalorder %v478, %v481
        %vm576 = vcmp.eq.s32.totalorder %v478, %v484
        %vm577 = vcmp.eq.s32.totalorder %v478, %v487
        %vm578 = vcmp.eq.s32.totalorder %v478, %v490
        %vm579 = vcmp.eq.s32.totalorder %v478, %v493
        %vm580 = vcmp.eq.s32.totalorder %v478, %v496
        %vm581 = vcmp.eq.s32.totalorder %v478, %v499
        %vm582 = vcmp.eq.s32.totalorder %v478, %v502
        %vm583 = vcmp.eq.s32.totalorder %v478, %v505
        %vm584 = vcmp.eq.s32.totalorder %v478, %v508
        %vm585 = vcmp.eq.s32.totalorder %v478, %v511
        %vm586 = vcmp.eq.s32.totalorder %v478, %v514
        %vm587 = vcmp.eq.s32.totalorder %v478, %v517
        %vm588 = vcmp.eq.s32.totalorder %v478, %v520
        %vm589 = vcmp.eq.s32.totalorder %v478, %v523
        %vm590 = vcmp.eq.s32.totalorder %v478, %v526
        %vm591 = vcmp.eq.s32.totalorder %v478, %v529
        %vm592 = vcmp.eq.s32.totalorder %v478, %v532
        %vm593 = vcmp.eq.s32.totalorder %v478, %v535
        %vm594 = vcmp.eq.s32.totalorder %v478, %v538
        %vm595 = vcmp.eq.s32.totalorder %v478, %v541
        %vm596 = vcmp.eq.s32.totalorder %v478, %v544
        %vm597 = vcmp.eq.s32.totalorder %v478, %v547
        %vm598 = vcmp.eq.s32.totalorder %v478, %v550
        %vm599 = vcmp.eq.s32.totalorder %v478, %v553
        %vm600 = vcmp.eq.s32.totalorder %v478, %v556
        %vm601 = vcmp.eq.s32.totalorder %v478, %v559
        %vm602 = vcmp.eq.s32.totalorder %v478, %v562
        %vm603 = vcmp.eq.s32.totalorder %v478, %v565
        %vm604 = vcmp.eq.s32.totalorder %v478, %v568
        %vm605 = vcmp.eq.s32.totalorder %v478, %v571
        %vm606 = vcmp.eq.s32.totalorder %v478, %v574
        %v607 = vsel %vm575, 1, 0
        %v608 = vsel %vm576, 1, 0
        %v609 = vsel %vm577, 1, 0
        %v610 = vsel %vm578, 1, 0
        %v611 = vsel %vm579, 1, 0
        %v612 = vsel %vm580, 1, 0
        %v613 = vsel %vm581, 1, 0
        %v614 = vsel %vm582, 1, 0
        %v615 = vsel %vm583, 1, 0
        %v616 = vsel %vm584, 1, 0
        %v617 = vsel %vm585, 1, 0
        %v618 = vsel %vm586, 1, 0
        %v619 = vsel %vm587, 1, 0
        %v620 = vsel %vm588, 1, 0
        %v621 = vsel %vm589, 1, 0
        %v622 = vsel %vm590, 1, 0
        %v623 = vsel %vm591, 1, 0
        %v624 = vsel %vm592, 1, 0
        %v625 = vsel %vm593, 1, 0
        %v626 = vsel %vm594, 1, 0
        %v627 = vsel %vm595, 1, 0
        %v628 = vsel %vm596, 1, 0
        %v629 = vsel %vm597, 1, 0
        %v630 = vsel %vm598, 1, 0
        %v631 = vsel %vm599, 1, 0
        %v632 = vsel %vm600, 1, 0
        %v633 = vsel %vm601, 1, 0
        %v634 = vsel %vm602, 1, 0
        %v635 = vsel %vm603, 1, 0
        %v636 = vsel %vm604, 1, 0
        %v637 = vsel %vm605, 1, 0
        %v638 = vsel %vm606, 1, 0
        %v639 = vcvt.s32.f32 %v607
        %v640 = vcvt.s32.f32 %v608
        %v641 = vcvt.s32.f32 %v609
        %v642 = vcvt.s32.f32 %v610
        %v643 = vcvt.s32.f32 %v611
        %v644 = vcvt.s32.f32 %v612
        %v645 = vcvt.s32.f32 %v613
        %v646 = vcvt.s32.f32 %v614
        %v647 = vcvt.s32.f32 %v615
        %v648 = vcvt.s32.f32 %v616
        %v649 = vcvt.s32.f32 %v617
        %v650 = vcvt.s32.f32 %v618
        %v651 = vcvt.s32.f32 %v619
        %v652 = vcvt.s32.f32 %v620
        %v653 = vcvt.s32.f32 %v621
        %v654 = vcvt.s32.f32 %v622
        %v655 = vcvt.s32.f32 %v623
        %v656 = vcvt.s32.f32 %v624
        %v657 = vcvt.s32.f32 %v625
        %v658 = vcvt.s32.f32 %v626
        %v659 = vcvt.s32.f32 %v627
        %v660 = vcvt.s32.f32 %v628
        %v661 = vcvt.s32.f32 %v629
        %v662 = vcvt.s32.f32 %v630
        %v663 = vcvt.s32.f32 %v631
        %v664 = vcvt.s32.f32 %v632
        %v665 = vcvt.s32.f32 %v633
        %v666 = vcvt.s32.f32 %v634
        %v667 = vcvt.s32.f32 %v635
        %v668 = vcvt.s32.f32 %v636
        %v669 = vcvt.s32.f32 %v637
        %v670 = vcvt.s32.f32 %v638
        %v671 = vpack.c.bf16 %v640, %v639
        %v672 = vpack.c.bf16 %v642, %v641
        %v673 = vpack.c.bf16 %v644, %v643
        %v674 = vpack.c.bf16 %v646, %v645
        %v675 = vpack.c.bf16 %v648, %v647
        %v676 = vpack.c.bf16 %v650, %v649
        %v677 = vpack.c.bf16 %v652, %v651
        %v678 = vpack.c.bf16 %v654, %v653
        %v679 = vpack.c.bf16 %v656, %v655
        %v680 = vpack.c.bf16 %v658, %v657
        %v681 = vpack.c.bf16 %v660, %v659
        %v682 = vpack.c.bf16 %v662, %v661
        %v683 = vpack.c.bf16 %v664, %v663
        %v684 = vpack.c.bf16 %v666, %v665
        %v685 = vpack.c.bf16 %v668, %v667
        %v686 = vpack.c.bf16 %v670, %v669
        %687 = vset.pattern.permute.xlu0 0
        %688 = vperm.xlu0 %687, %v445
        %v689 = vpop.permute.xlu0 %688
        %690 = vset.pattern.permute.xlu0 0
        %691 = vperm.xlu0 %690, %v446
        %v692 = vpop.permute.xlu0 %691
        %693 = vset.pattern.permute.xlu0 0
        %694 = vperm.xlu0 %693, %v447
        %v695 = vpop.permute.xlu0 %694
        %696 = vset.pattern.permute.xlu0 0
        %697 = vperm.xlu0 %696, %v448
        %v698 = vpop.permute.xlu0 %697
        %699 = vset.pattern.permute.xlu0 0
        %700 = vperm.xlu0 %699, %v449
        %v701 = vpop.permute.xlu0 %700
        %702 = vset.pattern.permute.xlu0 0
        %703 = vperm.xlu0 %702, %v450
        %v704 = vpop.permute.xlu0 %703
        %705 = vset.pattern.permute.xlu0 0
        %706 = vperm.xlu0 %705, %v451
        %v707 = vpop.permute.xlu0 %706
        %708 = vset.pattern.permute.xlu0 0
        %709 = vperm.xlu0 %708, %v452
        %v710 = vpop.permute.xlu0 %709
        %711 = vset.pattern.permute.xlu0 0
        %712 = vperm.xlu0 %711, %v453
        %v713 = vpop.permute.xlu0 %712
        %714 = vset.pattern.permute.xlu0 0
        %715 = vperm.xlu0 %714, %v454
        %v716 = vpop.permute.xlu0 %715
        %717 = vset.pattern.permute.xlu0 0
        %718 = vperm.xlu0 %717, %v455
        %v719 = vpop.permute.xlu0 %718
        %720 = vset.pattern.permute.xlu0 0
        %721 = vperm.xlu0 %720, %v456
        %v722 = vpop.permute.xlu0 %721
        %723 = vset.pattern.permute.xlu0 0
        %724 = vperm.xlu0 %723, %v457
        %v725 = vpop.permute.xlu0 %724
        %726 = vset.pattern.permute.xlu0 0
        %727 = vperm.xlu0 %726, %v458
        %v728 = vpop.permute.xlu0 %727
        %729 = vset.pattern.permute.xlu0 0
        %730 = vperm.xlu0 %729, %v459
        %v731 = vpop.permute.xlu0 %730
        %732 = vset.pattern.permute.xlu0 0
        %733 = vperm.xlu0 %732, %v460
        %v734 = vpop.permute.xlu0 %733
        %735 = vset.pattern.permute.xlu0 0
        %736 = vperm.xlu0 %735, %v461
        %v737 = vpop.permute.xlu0 %736
        %738 = vset.pattern.permute.xlu0 0
        %739 = vperm.xlu0 %738, %v462
        %v740 = vpop.permute.xlu0 %739
        %741 = vset.pattern.permute.xlu0 0
        %742 = vperm.xlu0 %741, %v463
        %v743 = vpop.permute.xlu0 %742
        %744 = vset.pattern.permute.xlu0 0
        %745 = vperm.xlu0 %744, %v464
        %v746 = vpop.permute.xlu0 %745
        %747 = vset.pattern.permute.xlu0 0
        %748 = vperm.xlu0 %747, %v465
        %v749 = vpop.permute.xlu0 %748
        %750 = vset.pattern.permute.xlu0 0
        %751 = vperm.xlu0 %750, %v466
        %v752 = vpop.permute.xlu0 %751
        %753 = vset.pattern.permute.xlu0 0
        %754 = vperm.xlu0 %753, %v467
        %v755 = vpop.permute.xlu0 %754
        %756 = vset.pattern.permute.xlu0 0
        %757 = vperm.xlu0 %756, %v468
        %v758 = vpop.permute.xlu0 %757
        %759 = vset.pattern.permute.xlu0 0
        %760 = vperm.xlu0 %759, %v469
        %v761 = vpop.permute.xlu0 %760
        %762 = vset.pattern.permute.xlu0 0
        %763 = vperm.xlu0 %762, %v470
        %v764 = vpop.permute.xlu0 %763
        %765 = vset.pattern.permute.xlu0 0
        %766 = vperm.xlu0 %765, %v471
        %v767 = vpop.permute.xlu0 %766
        %768 = vset.pattern.permute.xlu0 0
        %769 = vperm.xlu0 %768, %v472
        %v770 = vpop.permute.xlu0 %769
        %771 = vset.pattern.permute.xlu0 0
        %772 = vperm.xlu0 %771, %v473
        %v773 = vpop.permute.xlu0 %772
        %774 = vset.pattern.permute.xlu0 0
        %775 = vperm.xlu0 %774, %v474
        %v776 = vpop.permute.xlu0 %775
        %777 = vset.pattern.permute.xlu0 0
        %778 = vperm.xlu0 %777, %v475
        %v779 = vpop.permute.xlu0 %778
        %780 = vset.pattern.permute.xlu0 0
        %781 = vperm.xlu0 %780, %v476
        %v782 = vpop.permute.xlu0 %781
        %vm783 = vcmp.eq.s32.totalorder %v478, %v689
        %vm784 = vcmp.eq.s32.totalorder %v478, %v692
        %vm785 = vcmp.eq.s32.totalorder %v478, %v695
        %vm786 = vcmp.eq.s32.totalorder %v478, %v698
        %vm787 = vcmp.eq.s32.totalorder %v478, %v701
        %vm788 = vcmp.eq.s32.totalorder %v478, %v704
        %vm789 = vcmp.eq.s32.totalorder %v478, %v707
        %vm790 = vcmp.eq.s32.totalorder %v478, %v710
        %vm791 = vcmp.eq.s32.totalorder %v478, %v713
        %vm792 = vcmp.eq.s32.totalorder %v478, %v716
        %vm793 = vcmp.eq.s32.totalorder %v478, %v719
        %vm794 = vcmp.eq.s32.totalorder %v478, %v722
        %vm795 = vcmp.eq.s32.totalorder %v478, %v725
        %vm796 = vcmp.eq.s32.totalorder %v478, %v728
        %vm797 = vcmp.eq.s32.totalorder %v478, %v731
        %vm798 = vcmp.eq.s32.totalorder %v478, %v734
        %vm799 = vcmp.eq.s32.totalorder %v478, %v737
        %vm800 = vcmp.eq.s32.totalorder %v478, %v740
        %vm801 = vcmp.eq.s32.totalorder %v478, %v743
        %vm802 = vcmp.eq.s32.totalorder %v478, %v746
        %vm803 = vcmp.eq.s32.totalorder %v478, %v749
        %vm804 = vcmp.eq.s32.totalorder %v478, %v752
        %vm805 = vcmp.eq.s32.totalorder %v478, %v755
        %vm806 = vcmp.eq.s32.totalorder %v478, %v758
        %vm807 = vcmp.eq.s32.totalorder %v478, %v761
        %vm808 = vcmp.eq.s32.totalorder %v478, %v764
        %vm809 = vcmp.eq.s32.totalorder %v478, %v767
        %vm810 = vcmp.eq.s32.totalorder %v478, %v770
        %vm811 = vcmp.eq.s32.totalorder %v478, %v773
        %vm812 = vcmp.eq.s32.totalorder %v478, %v776
        %vm813 = vcmp.eq.s32.totalorder %v478, %v779
        %vm814 = vcmp.eq.s32.totalorder %v478, %v782
        %v815 = vsel %vm783, 1, 0
        %v816 = vsel %vm784, 1, 0
        %v817 = vsel %vm785, 1, 0
        %v818 = vsel %vm786, 1, 0
        %v819 = vsel %vm787, 1, 0
        %v820 = vsel %vm788, 1, 0
        %v821 = vsel %vm789, 1, 0
        %v822 = vsel %vm790, 1, 0
        %v823 = vsel %vm791, 1, 0
        %v824 = vsel %vm792, 1, 0
        %v825 = vsel %vm793, 1, 0
        %v826 = vsel %vm794, 1, 0
        %v827 = vsel %vm795, 1, 0
        %v828 = vsel %vm796, 1, 0
        %v829 = vsel %vm797, 1, 0
        %v830 = vsel %vm798, 1, 0
        %v831 = vsel %vm799, 1, 0
        %v832 = vsel %vm800, 1, 0
        %v833 = vsel %vm801, 1, 0
        %v834 = vsel %vm802, 1, 0
        %v835 = vsel %vm803, 1, 0
        %v836 = vsel %vm804, 1, 0
        %v837 = vsel %vm805, 1, 0
        %v838 = vsel %vm806, 1, 0
        %v839 = vsel %vm807, 1, 0
        %v840 = vsel %vm808, 1, 0
        %v841 = vsel %vm809, 1, 0
        %v842 = vsel %vm810, 1, 0
        %v843 = vsel %vm811, 1, 0
        %v844 = vsel %vm812, 1, 0
        %v845 = vsel %vm813, 1, 0
        %v846 = vsel %vm814, 1, 0
        %v847 = vcvt.s32.f32 %v815
        %v848 = vcvt.s32.f32 %v816
        %v849 = vcvt.s32.f32 %v817
        %v850 = vcvt.s32.f32 %v818
        %v851 = vcvt.s32.f32 %v819
        %v852 = vcvt.s32.f32 %v820
        %v853 = vcvt.s32.f32 %v821
        %v854 = vcvt.s32.f32 %v822
        %v855 = vcvt.s32.f32 %v823
        %v856 = vcvt.s32.f32 %v824
        %v857 = vcvt.s32.f32 %v825
        %v858 = vcvt.s32.f32 %v826
        %v859 = vcvt.s32.f32 %v827
        %v860 = vcvt.s32.f32 %v828
        %v861 = vcvt.s32.f32 %v829
        %v862 = vcvt.s32.f32 %v830
        %v863 = vcvt.s32.f32 %v831
        %v864 = vcvt.s32.f32 %v832
        %v865 = vcvt.s32.f32 %v833
        %v866 = vcvt.s32.f32 %v834
        %v867 = vcvt.s32.f32 %v835
        %v868 = vcvt.s32.f32 %v836
        %v869 = vcvt.s32.f32 %v837
        %v870 = vcvt.s32.f32 %v838
        %v871 = vcvt.s32.f32 %v839
        %v872 = vcvt.s32.f32 %v840
        %v873 = vcvt.s32.f32 %v841
        %v874 = vcvt.s32.f32 %v842
        %v875 = vcvt.s32.f32 %v843
        %v876 = vcvt.s32.f32 %v844
        %v877 = vcvt.s32.f32 %v845
        %v878 = vcvt.s32.f32 %v846
        %v879 = vpack.c.bf16 %v848, %v847
        %v880 = vpack.c.bf16 %v850, %v849
        %v881 = vpack.c.bf16 %v852, %v851
        %v882 = vpack.c.bf16 %v854, %v853
        %v883 = vpack.c.bf16 %v856, %v855
        %v884 = vpack.c.bf16 %v858, %v857
        %v885 = vpack.c.bf16 %v860, %v859
        %v886 = vpack.c.bf16 %v862, %v861
        %v887 = vpack.c.bf16 %v864, %v863
        %v888 = vpack.c.bf16 %v866, %v865
        %v889 = vpack.c.bf16 %v868, %v867
        %v890 = vpack.c.bf16 %v870, %v869
        %v891 = vpack.c.bf16 %v872, %v871
        %v892 = vpack.c.bf16 %v874, %v873
        %v893 = vpack.c.bf16 %v876, %v875
        %v894 = vpack.c.bf16 %v878, %v877
        %v895 = vld [vmem:[%s0] sm:$0xf]
        %v896 = vld [vmem:[%s0 + $0x4] sm:$0xf]
        %v897 = vld [vmem:[%s0 + $0x8] sm:$0xf]
        %v898 = vld [vmem:[%s0 + $0xc] sm:$0xf]
        %v899 = vld [vmem:[%s0 + $0x10] sm:$0xf]
        %v900 = vld [vmem:[%s0 + $0x14] sm:$0xf]
        %v901 = vld [vmem:[%s0 + $0x18] sm:$0xf]
        %v902 = vld [vmem:[%s0 + $0x1c] sm:$0xf]
        %v903 = vld [vmem:[%s0 + $0x20] sm:$0xf]
        %v904 = vld [vmem:[%s0 + $0x24] sm:$0xf]
        %v905 = vld [vmem:[%s0 + $0x28] sm:$0xf]
        %v906 = vld [vmem:[%s0 + $0x2c] sm:$0xf]
        %v907 = vld [vmem:[%s0 + $0x30] sm:$0xf]
        %v908 = vld [vmem:[%s0 + $0x34] sm:$0xf]
        %v909 = vld [vmem:[%s0 + $0x38] sm:$0xf]
        %v910 = vld [vmem:[%s0 + $0x3c] sm:$0xf]
        %v927 = vunpack.c.l.b16 %v895
        %v928 = vunpack.c.l.b16 %v896
        %v929 = vunpack.c.l.b16 %v897
        %v930 = vunpack.c.l.b16 %v898
        %v931 = vunpack.c.l.b16 %v899
        %v932 = vunpack.c.l.b16 %v900
        %v933 = vunpack.c.l.b16 %v901
        %v934 = vunpack.c.l.b16 %v902
        %v935 = vunpack.c.l.b16 %v903
        %v936 = vunpack.c.l.b16 %v904
        %v937 = vunpack.c.l.b16 %v905
        %v938 = vunpack.c.l.b16 %v906
        %v939 = vunpack.c.l.b16 %v907
        %v940 = vunpack.c.l.b16 %v908
        %v941 = vunpack.c.l.b16 %v909
        %v942 = vunpack.c.l.b16 %v910
        %v943 = vpack.c.b16 %v928, %v927
        %v944 = vpack.c.b16 %v930, %v929
        %v945 = vpack.c.b16 %v932, %v931
        %v946 = vpack.c.b16 %v934, %v933
        %v947 = vpack.c.b16 %v936, %v935
        %v948 = vpack.c.b16 %v938, %v937
        %v949 = vpack.c.b16 %v940, %v939
        %v950 = vpack.c.b16 %v942, %v941
        %959 = vmatprep.subr.bf16.mxu0 0
        %960 = vmatpush1.bf16.msra.mxu0 %v943
        %961 = vmatprep.subr.bf16.mxu0 0
        %962 = vmatpush1.bf16.msra.mxu0 %v944
        %963 = vmatprep.subr.bf16.mxu0 0
        %964 = vmatpush1.bf16.msra.mxu0 %v945
        %965 = vmatprep.subr.bf16.mxu0 0
        %966 = vmatpush1.bf16.msra.mxu0 %v946
        %967 = vmatprep.subr.bf16.mxu0 0
        %968 = vmatpush1.bf16.msra.mxu0 %v947
        %969 = vmatprep.subr.bf16.mxu0 0
        %970 = vmatpush1.bf16.msra.mxu0 %v948
        %971 = vmatprep.subr.bf16.mxu0 0
        %972 = vmatpush1.bf16.msra.mxu0 %v949
        %973 = vmatprep.subr.bf16.mxu0 0
        %974 = vmatpush1.bf16.msra.mxu0 %v950
        %975 = vmatprep.subr.bf16.mxu0 0
        %976 = vmatpush1.bf16.msra.mxu0 0
        %977 = vmatprep.subr.bf16.mxu0 0
        %978 = vmatpush1.bf16.msra.mxu0 0
        %979 = vmatprep.subr.bf16.mxu0 0
        %980 = vmatpush1.bf16.msra.mxu0 0
        %981 = vmatprep.subr.bf16.mxu0 0
        %982 = vmatpush1.bf16.msra.mxu0 0
        %983 = vmatprep.subr.bf16.mxu0 0
        %984 = vmatpush1.bf16.msra.mxu0 0
        %985 = vmatprep.subr.bf16.mxu0 0
        %986 = vmatpush1.bf16.msra.mxu0 0
        %987 = vmatprep.subr.bf16.mxu0 0
        %988 = vmatpush1.bf16.msra.mxu0 0
        %989 = vmatprep.subr.bf16.mxu0 0
        %990 = vmatpush1.bf16.msra.mxu0 0
        %991 = vmatprep.mubr.bf16.mxu0 0
        %992 = vmatmul.mubr.bf16.gmra.mrb[0].mxu0 %v671
        %v993 = vpop.f32.mrb[0].mxu0
        %v994 = vadd.f32 0.0, %v993
        %v995 = vpop.f32.mrb[0].mxu0
        %v996 = vpop.f32.mrb[0].mxu0
        %v997 = vadd.f32 0.0, %v996
        %v998 = vpop.f32.mrb[0].mxu0
        %999 = vmatprep.mubr.bf16.mxu0 0
        %1000 = vmatmul.mubr.bf16.gmra.mrb[0].mxu0 %v672
        %v1001 = vpop.f32.mrb[0].mxu0
        %v1002 = vadd.f32 0.0, %v1001
        %v1003 = vpop.f32.mrb[0].mxu0
        %v1004 = vpop.f32.mrb[0].mxu0
        %v1005 = vadd.f32 0.0, %v1004
        %v1006 = vpop.f32.mrb[0].mxu0
        %1007 = vmatprep.mubr.bf16.mxu0 0
        %1008 = vmatmul.mubr.bf16.gmra.mrb[0].mxu0 %v673
        %v1009 = vpop.f32.mrb[0].mxu0
        %v1010 = vadd.f32 0.0, %v1009
        %v1011 = vpop.f32.mrb[0].mxu0
        %v1012 = vpop.f32.mrb[0].mxu0
        %v1013 = vadd.f32 0.0, %v1012
        %v1014 = vpop.f32.mrb[0].mxu0
        %1015 = vmatprep.mubr.bf16.mxu0 0
        %1016 = vmatmul.mubr.bf16.gmra.mrb[0].mxu0 %v674
        %v1017 = vpop.f32.mrb[0].mxu0
        %v1018 = vadd.f32 0.0, %v1017
        %v1019 = vpop.f32.mrb[0].mxu0
        %v1020 = vpop.f32.mrb[0].mxu0
        %v1021 = vadd.f32 0.0, %v1020
        %v1022 = vpop.f32.mrb[0].mxu0
        %1023 = vmatprep.mubr.bf16.mxu0 0
        %1024 = vmatmul.mubr.bf16.gmra.mrb[0].mxu0 %v675
        %v1025 = vpop.f32.mrb[0].mxu0
        %v1026 = vadd.f32 0.0, %v1025
        %v1027 = vpop.f32.mrb[0].mxu0
        %v1028 = vpop.f32.mrb[0].mxu0
        %v1029 = vadd.f32 0.0, %v1028
        %v1030 = vpop.f32.mrb[0].mxu0
        %1031 = vmatprep.mubr.bf16.mxu0 0
        %1032 = vmatmul.mubr.bf16.gmra.mrb[0].mxu0 %v676
        %v1033 = vpop.f32.mrb[0].mxu0
        %v1034 = vadd.f32 0.0, %v1033
        %v1035 = vpop.f32.mrb[0].mxu0
        %v1036 = vpop.f32.mrb[0].mxu0
        %v1037 = vadd.f32 0.0, %v1036
        %v1038 = vpop.f32.mrb[0].mxu0
        %1039 = vmatprep.mubr.bf16.mxu0 0
        %1040 = vmatmul.mubr.bf16.gmra.mrb[0].mxu0 %v677
        %v1041 = vpop.f32.mrb[0].mxu0
        %v1042 = vadd.f32 0.0, %v1041
        %v1043 = vpop.f32.mrb[0].mxu0
        %v1044 = vpop.f32.mrb[0].mxu0
        %v1045 = vadd.f32 0.0, %v1044
        %v1046 = vpop.f32.mrb[0].mxu0
        %1047 = vmatprep.mubr.bf16.mxu0 0
        %1048 = vmatmul.mubr.bf16.gmra.mrb[0].mxu0 %v678
        %v1049 = vpop.f32.mrb[0].mxu0
        %v1050 = vadd.f32 0.0, %v1049
        %v1051 = vpop.f32.mrb[0].mxu0
        %v1052 = vpop.f32.mrb[0].mxu0
        %v1053 = vadd.f32 0.0, %v1052
        %v1054 = vpop.f32.mrb[0].mxu0
        %1055 = vmatprep.mubr.bf16.mxu0 0
        %1056 = vmatmul.mubr.bf16.gmra.mrb[0].mxu0 %v679
        %v1057 = vpop.f32.mrb[0].mxu0
        %v1058 = vadd.f32 0.0, %v1057
        %v1059 = vpop.f32.mrb[0].mxu0
        %v1060 = vpop.f32.mrb[0].mxu0
        %v1061 = vadd.f32 0.0, %v1060
        %v1062 = vpop.f32.mrb[0].mxu0
        %1063 = vmatprep.mubr.bf16.mxu0 0
        %1064 = vmatmul.mubr.bf16.gmra.mrb[0].mxu0 %v680
        %v1065 = vpop.f32.mrb[0].mxu0
        %v1066 = vadd.f32 0.0, %v1065
        %v1067 = vpop.f32.mrb[0].mxu0
        %v1068 = vpop.f32.mrb[0].mxu0
        %v1069 = vadd.f32 0.0, %v1068
        %v1070 = vpop.f32.mrb[0].mxu0
        %1071 = vmatprep.mubr.bf16.mxu0 0
        %1072 = vmatmul.mubr.bf16.gmra.mrb[0].mxu0 %v681
        %v1073 = vpop.f32.mrb[0].mxu0
        %v1074 = vadd.f32 0.0, %v1073
        %v1075 = vpop.f32.mrb[0].mxu0
        %v1076 = vpop.f32.mrb[0].mxu0
        %v1077 = vadd.f32 0.0, %v1076
        %v1078 = vpop.f32.mrb[0].mxu0
        %1079 = vmatprep.mubr.bf16.mxu0 0
        %1080 = vmatmul.mubr.bf16.gmra.mrb[0].mxu0 %v682
        %v1081 = vpop.f32.mrb[0].mxu0
        %v1082 = vadd.f32 0.0, %v1081
        %v1083 = vpop.f32.mrb[0].mxu0
        %v1084 = vpop.f32.mrb[0].mxu0
        %v1085 = vadd.f32 0.0, %v1084
        %v1086 = vpop.f32.mrb[0].mxu0
        %1087 = vmatprep.mubr.bf16.mxu0 0
        %1088 = vmatmul.mubr.bf16.gmra.mrb[0].mxu0 %v683
        %v1089 = vpop.f32.mrb[0].mxu0
        %v1090 = vadd.f32 0.0, %v1089
        %v1091 = vpop.f32.mrb[0].mxu0
        %v1092 = vpop.f32.mrb[0].mxu0
        %v1093 = vadd.f32 0.0, %v1092
        %v1094 = vpop.f32.mrb[0].mxu0
        %1095 = vmatprep.mubr.bf16.mxu0 0
        %1096 = vmatmul.mubr.bf16.gmra.mrb[0].mxu0 %v684
        %v1097 = vpop.f32.mrb[0].mxu0
        %v1098 = vadd.f32 0.0, %v1097
        %v1099 = vpop.f32.mrb[0].mxu0
        %v1100 = vpop.f32.mrb[0].mxu0
        %v1101 = vadd.f32 0.0, %v1100
        %v1102 = vpop.f32.mrb[0].mxu0
        %1103 = vmatprep.mubr.bf16.mxu0 0
        %1104 = vmatmul.mubr.bf16.gmra.mrb[0].mxu0 %v685
        %v1105 = vpop.f32.mrb[0].mxu0
        %v1106 = vadd.f32 0.0, %v1105
        %v1107 = vpop.f32.mrb[0].mxu0
        %v1108 = vpop.f32.mrb[0].mxu0
        %v1109 = vadd.f32 0.0, %v1108
        %v1110 = vpop.f32.mrb[0].mxu0
        %1111 = vmatprep.mubr.bf16.mxu0 0
        %1112 = vmatmul.mubr.bf16.gmra.mrb[0].mxu0 %v686
        %v1113 = vpop.f32.mrb[0].mxu0
        %v1114 = vadd.f32 0.0, %v1113
        %v1115 = vpop.f32.mrb[0].mxu0
        %v1116 = vpop.f32.mrb[0].mxu0
        %v1117 = vadd.f32 0.0, %v1116
        %v1118 = vpop.f32.mrb[0].mxu0
        %1119 = vdwg.mxu0
        %v1120 = vpack.c.bf16 %v997, %v994
        %v1121 = vpack.c.bf16 %v1005, %v1002
        %v1122 = vpack.c.bf16 %v1013, %v1010
        %v1123 = vpack.c.bf16 %v1021, %v1018
        %v1124 = vpack.c.bf16 %v1029, %v1026
        %v1125 = vpack.c.bf16 %v1037, %v1034
        %v1126 = vpack.c.bf16 %v1045, %v1042
        %v1127 = vpack.c.bf16 %v1053, %v1050
        %v1128 = vpack.c.bf16 %v1061, %v1058
        %v1129 = vpack.c.bf16 %v1069, %v1066
        %v1130 = vpack.c.bf16 %v1077, %v1074
        %v1131 = vpack.c.bf16 %v1085, %v1082
        %v1132 = vpack.c.bf16 %v1093, %v1090
        %v1133 = vpack.c.bf16 %v1101, %v1098
        %v1134 = vpack.c.bf16 %v1109, %v1106
        %v1135 = vpack.c.bf16 %v1117, %v1114
        %v1136 = vld [vmem:[%s1] sm:$0xf]
        %v1137 = vld [vmem:[%s1 + $0x4] sm:$0xf]
        %v1138 = vld [vmem:[%s1 + $0x8] sm:$0xf]
        %v1139 = vld [vmem:[%s1 + $0xc] sm:$0xf]
        %v1140 = vld [vmem:[%s1 + $0x10] sm:$0xf]
        %v1141 = vld [vmem:[%s1 + $0x14] sm:$0xf]
        %v1142 = vld [vmem:[%s1 + $0x18] sm:$0xf]
        %v1143 = vld [vmem:[%s1 + $0x1c] sm:$0xf]
        %v1144 = vld [vmem:[%s1 + $0x20] sm:$0xf]
        %v1145 = vld [vmem:[%s1 + $0x24] sm:$0xf]
        %v1146 = vld [vmem:[%s1 + $0x28] sm:$0xf]
        %v1147 = vld [vmem:[%s1 + $0x2c] sm:$0xf]
        %v1148 = vld [vmem:[%s1 + $0x30] sm:$0xf]
        %v1149 = vld [vmem:[%s1 + $0x34] sm:$0xf]
        %v1150 = vld [vmem:[%s1 + $0x38] sm:$0xf]
        %v1151 = vld [vmem:[%s1 + $0x3c] sm:$0xf]
        %v1168 = vunpack.c.l.b16 %v1136
        %v1169 = vunpack.c.l.b16 %v1137
        %v1170 = vunpack.c.l.b16 %v1138
        %v1171 = vunpack.c.l.b16 %v1139
        %v1172 = vunpack.c.l.b16 %v1140
        %v1173 = vunpack.c.l.b16 %v1141
        %v1174 = vunpack.c.l.b16 %v1142
        %v1175 = vunpack.c.l.b16 %v1143
        %v1176 = vunpack.c.l.b16 %v1144
        %v1177 = vunpack.c.l.b16 %v1145
        %v1178 = vunpack.c.l.b16 %v1146
        %v1179 = vunpack.c.l.b16 %v1147
        %v1180 = vunpack.c.l.b16 %v1148
        %v1181 = vunpack.c.l.b16 %v1149
        %v1182 = vunpack.c.l.b16 %v1150
        %v1183 = vunpack.c.l.b16 %v1151
        %v1184 = vpack.c.b16 %v1169, %v1168
        %v1185 = vpack.c.b16 %v1171, %v1170
        %v1186 = vpack.c.b16 %v1173, %v1172
        %v1187 = vpack.c.b16 %v1175, %v1174
        %v1188 = vpack.c.b16 %v1177, %v1176
        %v1189 = vpack.c.b16 %v1179, %v1178
        %v1190 = vpack.c.b16 %v1181, %v1180
        %v1191 = vpack.c.b16 %v1183, %v1182
        %1200 = vmatprep.subr.bf16.mxu0 0
        %1201 = vmatpush1.bf16.msra.mxu0 %v1184
        %1202 = vmatprep.subr.bf16.mxu0 0
        %1203 = vmatpush1.bf16.msra.mxu0 %v1185
        %1204 = vmatprep.subr.bf16.mxu0 0
        %1205 = vmatpush1.bf16.msra.mxu0 %v1186
        %1206 = vmatprep.subr.bf16.mxu0 0
        %1207 = vmatpush1.bf16.msra.mxu0 %v1187
        %1208 = vmatprep.subr.bf16.mxu0 0
        %1209 = vmatpush1.bf16.msra.mxu0 %v1188
        %1210 = vmatprep.subr.bf16.mxu0 0
        %1211 = vmatpush1.bf16.msra.mxu0 %v1189
        %1212 = vmatprep.subr.bf16.mxu0 0
        %1213 = vmatpush1.bf16.msra.mxu0 %v1190
        %1214 = vmatprep.subr.bf16.mxu0 0
        %1215 = vmatpush1.bf16.msra.mxu0 %v1191
        %1216 = vmatprep.subr.bf16.mxu0 0
        %1217 = vmatpush1.bf16.msra.mxu0 0
        %1218 = vmatprep.subr.bf16.mxu0 0
        %1219 = vmatpush1.bf16.msra.mxu0 0
        %1220 = vmatprep.subr.bf16.mxu0 0
        %1221 = vmatpush1.bf16.msra.mxu0 0
        %1222 = vmatprep.subr.bf16.mxu0 0
        %1223 = vmatpush1.bf16.msra.mxu0 0
        %1224 = vmatprep.subr.bf16.mxu0 0
        %1225 = vmatpush1.bf16.msra.mxu0 0
        %1226 = vmatprep.subr.bf16.mxu0 0
        %1227 = vmatpush1.bf16.msra.mxu0 0
        %1228 = vmatprep.subr.bf16.mxu0 0
        %1229 = vmatpush1.bf16.msra.mxu0 0
        %1230 = vmatprep.subr.bf16.mxu0 0
        %1231 = vmatpush1.bf16.msra.mxu0 0
        %1232 = vmatprep.mubr.bf16.mxu0 0
        %1233 = vmatmul.mubr.bf16.gmra.mrb[0].mxu0 %v879
        %v1234 = vpop.f32.mrb[0].mxu0
        %v1235 = vadd.f32 0.0, %v1234
        %v1236 = vpop.f32.mrb[0].mxu0
        %v1237 = vpop.f32.mrb[0].mxu0
        %v1238 = vadd.f32 0.0, %v1237
        %v1239 = vpop.f32.mrb[0].mxu0
        %1240 = vmatprep.mubr.bf16.mxu0 0
        %1241 = vmatmul.mubr.bf16.gmra.mrb[0].mxu0 %v880
        %v1242 = vpop.f32.mrb[0].mxu0
        %v1243 = vadd.f32 0.0, %v1242
        %v1244 = vpop.f32.mrb[0].mxu0
        %v1245 = vpop.f32.mrb[0].mxu0
        %v1246 = vadd.f32 0.0, %v1245
        %v1247 = vpop.f32.mrb[0].mxu0
        %1248 = vmatprep.mubr.bf16.mxu0 0
        %1249 = vmatmul.mubr.bf16.gmra.mrb[0].mxu0 %v881
        %v1250 = vpop.f32.mrb[0].mxu0
        %v1251 = vadd.f32 0.0, %v1250
        %v1252 = vpop.f32.mrb[0].mxu0
        %v1253 = vpop.f32.mrb[0].mxu0
        %v1254 = vadd.f32 0.0, %v1253
        %v1255 = vpop.f32.mrb[0].mxu0
        %1256 = vmatprep.mubr.bf16.mxu0 0
        %1257 = vmatmul.mubr.bf16.gmra.mrb[0].mxu0 %v882
        %v1258 = vpop.f32.mrb[0].mxu0
        %v1259 = vadd.f32 0.0, %v1258
        %v1260 = vpop.f32.mrb[0].mxu0
        %v1261 = vpop.f32.mrb[0].mxu0
        %v1262 = vadd.f32 0.0, %v1261
        %v1263 = vpop.f32.mrb[0].mxu0
        %1264 = vmatprep.mubr.bf16.mxu0 0
        %1265 = vmatmul.mubr.bf16.gmra.mrb[0].mxu0 %v883
        %v1266 = vpop.f32.mrb[0].mxu0
        %v1267 = vadd.f32 0.0, %v1266
        %v1268 = vpop.f32.mrb[0].mxu0
        %v1269 = vpop.f32.mrb[0].mxu0
        %v1270 = vadd.f32 0.0, %v1269
        %v1271 = vpop.f32.mrb[0].mxu0
        %1272 = vmatprep.mubr.bf16.mxu0 0
        %1273 = vmatmul.mubr.bf16.gmra.mrb[0].mxu0 %v884
        %v1274 = vpop.f32.mrb[0].mxu0
        %v1275 = vadd.f32 0.0, %v1274
        %v1276 = vpop.f32.mrb[0].mxu0
        %v1277 = vpop.f32.mrb[0].mxu0
        %v1278 = vadd.f32 0.0, %v1277
        %v1279 = vpop.f32.mrb[0].mxu0
        %1280 = vmatprep.mubr.bf16.mxu0 0
        %1281 = vmatmul.mubr.bf16.gmra.mrb[0].mxu0 %v885
        %v1282 = vpop.f32.mrb[0].mxu0
        %v1283 = vadd.f32 0.0, %v1282
        %v1284 = vpop.f32.mrb[0].mxu0
        %v1285 = vpop.f32.mrb[0].mxu0
        %v1286 = vadd.f32 0.0, %v1285
        %v1287 = vpop.f32.mrb[0].mxu0
        %1288 = vmatprep.mubr.bf16.mxu0 0
        %1289 = vmatmul.mubr.bf16.gmra.mrb[0].mxu0 %v886
        %v1290 = vpop.f32.mrb[0].mxu0
        %v1291 = vadd.f32 0.0, %v1290
        %v1292 = vpop.f32.mrb[0].mxu0
        %v1293 = vpop.f32.mrb[0].mxu0
        %v1294 = vadd.f32 0.0, %v1293
        %v1295 = vpop.f32.mrb[0].mxu0
        %1296 = vmatprep.mubr.bf16.mxu0 0
        %1297 = vmatmul.mubr.bf16.gmra.mrb[0].mxu0 %v887
        %v1298 = vpop.f32.mrb[0].mxu0
        %v1299 = vadd.f32 0.0, %v1298
        %v1300 = vpop.f32.mrb[0].mxu0
        %v1301 = vpop.f32.mrb[0].mxu0
        %v1302 = vadd.f32 0.0, %v1301
        %v1303 = vpop.f32.mrb[0].mxu0
        %1304 = vmatprep.mubr.bf16.mxu0 0
        %1305 = vmatmul.mubr.bf16.gmra.mrb[0].mxu0 %v888
        %v1306 = vpop.f32.mrb[0].mxu0
        %v1307 = vadd.f32 0.0, %v1306
        %v1308 = vpop.f32.mrb[0].mxu0
        %v1309 = vpop.f32.mrb[0].mxu0
        %v1310 = vadd.f32 0.0, %v1309
        %v1311 = vpop.f32.mrb[0].mxu0
        %1312 = vmatprep.mubr.bf16.mxu0 0
        %1313 = vmatmul.mubr.bf16.gmra.mrb[0].mxu0 %v889
        %v1314 = vpop.f32.mrb[0].mxu0
        %v1315 = vadd.f32 0.0, %v1314
        %v1316 = vpop.f32.mrb[0].mxu0
        %v1317 = vpop.f32.mrb[0].mxu0
        %v1318 = vadd.f32 0.0, %v1317
        %v1319 = vpop.f32.mrb[0].mxu0
        %1320 = vmatprep.mubr.bf16.mxu0 0
        %1321 = vmatmul.mubr.bf16.gmra.mrb[0].mxu0 %v890
        %v1322 = vpop.f32.mrb[0].mxu0
        %v1323 = vadd.f32 0.0, %v1322
        %v1324 = vpop.f32.mrb[0].mxu0
        %v1325 = vpop.f32.mrb[0].mxu0
        %v1326 = vadd.f32 0.0, %v1325
        %v1327 = vpop.f32.mrb[0].mxu0
        %1328 = vmatprep.mubr.bf16.mxu0 0
        %1329 = vmatmul.mubr.bf16.gmra.mrb[0].mxu0 %v891
        %v1330 = vpop.f32.mrb[0].mxu0
        %v1331 = vadd.f32 0.0, %v1330
        %v1332 = vpop.f32.mrb[0].mxu0
        %v1333 = vpop.f32.mrb[0].mxu0
        %v1334 = vadd.f32 0.0, %v1333
        %v1335 = vpop.f32.mrb[0].mxu0
        %1336 = vmatprep.mubr.bf16.mxu0 0
        %1337 = vmatmul.mubr.bf16.gmra.mrb[0].mxu0 %v892
        %v1338 = vpop.f32.mrb[0].mxu0
        %v1339 = vadd.f32 0.0, %v1338
        %v1340 = vpop.f32.mrb[0].mxu0
        %v1341 = vpop.f32.mrb[0].mxu0
        %v1342 = vadd.f32 0.0, %v1341
        %v1343 = vpop.f32.mrb[0].mxu0
        %1344 = vmatprep.mubr.bf16.mxu0 0
        %1345 = vmatmul.mubr.bf16.gmra.mrb[0].mxu0 %v893
        %v1346 = vpop.f32.mrb[0].mxu0
        %v1347 = vadd.f32 0.0, %v1346
        %v1348 = vpop.f32.mrb[0].mxu0
        %v1349 = vpop.f32.mrb[0].mxu0
        %v1350 = vadd.f32 0.0, %v1349
        %v1351 = vpop.f32.mrb[0].mxu0
        %1352 = vmatprep.mubr.bf16.mxu0 0
        %1353 = vmatmul.mubr.bf16.gmra.mrb[0].mxu0 %v894
        %v1354 = vpop.f32.mrb[0].mxu0
        %v1355 = vadd.f32 0.0, %v1354
        %v1356 = vpop.f32.mrb[0].mxu0
        %v1357 = vpop.f32.mrb[0].mxu0
        %v1358 = vadd.f32 0.0, %v1357
        %v1359 = vpop.f32.mrb[0].mxu0
        %1360 = vdwg.mxu0
        %v1361 = vpack.c.bf16 %v1238, %v1235
        %v1362 = vpack.c.bf16 %v1246, %v1243
        %v1363 = vpack.c.bf16 %v1254, %v1251
        %v1364 = vpack.c.bf16 %v1262, %v1259
        %v1365 = vpack.c.bf16 %v1270, %v1267
        %v1366 = vpack.c.bf16 %v1278, %v1275
        %v1367 = vpack.c.bf16 %v1286, %v1283
        %v1368 = vpack.c.bf16 %v1294, %v1291
        %v1369 = vpack.c.bf16 %v1302, %v1299
        %v1370 = vpack.c.bf16 %v1310, %v1307
        %v1371 = vpack.c.bf16 %v1318, %v1315
        %v1372 = vpack.c.bf16 %v1326, %v1323
        %v1373 = vpack.c.bf16 %v1334, %v1331
        %v1374 = vpack.c.bf16 %v1342, %v1339
        %v1375 = vpack.c.bf16 %v1350, %v1347
        %v1376 = vpack.c.bf16 %v1358, %v1355
        %v1377 = vld [vmem:[%s2] sm:$0xf]
        %v1378 = vld [vmem:[%s2 + $0x4] sm:$0xf]
        %v1379 = vld [vmem:[%s2 + $0x8] sm:$0xf]
        %v1380 = vld [vmem:[%s2 + $0xc] sm:$0xf]
        %v1381 = vld [vmem:[%s2 + $0x10] sm:$0xf]
        %v1382 = vld [vmem:[%s2 + $0x14] sm:$0xf]
        %v1383 = vld [vmem:[%s2 + $0x18] sm:$0xf]
        %v1384 = vld [vmem:[%s2 + $0x1c] sm:$0xf]
        %v1385 = vld [vmem:[%s2 + $0x20] sm:$0xf]
        %v1386 = vld [vmem:[%s2 + $0x24] sm:$0xf]
        %v1387 = vld [vmem:[%s2 + $0x28] sm:$0xf]
        %v1388 = vld [vmem:[%s2 + $0x2c] sm:$0xf]
        %v1389 = vld [vmem:[%s2 + $0x30] sm:$0xf]
        %v1390 = vld [vmem:[%s2 + $0x34] sm:$0xf]
        %v1391 = vld [vmem:[%s2 + $0x38] sm:$0xf]
        %v1392 = vld [vmem:[%s2 + $0x3c] sm:$0xf]
        %v1409 = vunpack.c.l.b16 %v1377
        %v1410 = vunpack.c.l.b16 %v1378
        %v1411 = vunpack.c.l.b16 %v1379
        %v1412 = vunpack.c.l.b16 %v1380
        %v1413 = vunpack.c.l.b16 %v1381
        %v1414 = vunpack.c.l.b16 %v1382
        %v1415 = vunpack.c.l.b16 %v1383
        %v1416 = vunpack.c.l.b16 %v1384
        %v1417 = vunpack.c.l.b16 %v1385
        %v1418 = vunpack.c.l.b16 %v1386
        %v1419 = vunpack.c.l.b16 %v1387
        %v1420 = vunpack.c.l.b16 %v1388
        %v1421 = vunpack.c.l.b16 %v1389
        %v1422 = vunpack.c.l.b16 %v1390
        %v1423 = vunpack.c.l.b16 %v1391
        %v1424 = vunpack.c.l.b16 %v1392
        %v1425 = vpack.c.b16 %v1410, %v1409
        %v1426 = vpack.c.b16 %v1412, %v1411
        %v1427 = vpack.c.b16 %v1414, %v1413
        %v1428 = vpack.c.b16 %v1416, %v1415
        %v1429 = vpack.c.b16 %v1418, %v1417
        %v1430 = vpack.c.b16 %v1420, %v1419
        %v1431 = vpack.c.b16 %v1422, %v1421
        %v1432 = vpack.c.b16 %v1424, %v1423
        %1441 = vmatprep.subr.bf16.mxu0 0
        %1442 = vmatpush1.bf16.msra.mxu0 %v1425
        %1443 = vmatprep.subr.bf16.mxu0 0
        %1444 = vmatpush1.bf16.msra.mxu0 %v1426
        %1445 = vmatprep.subr.bf16.mxu0 0
        %1446 = vmatpush1.bf16.msra.mxu0 %v1427
        %1447 = vmatprep.subr.bf16.mxu0 0
        %1448 = vmatpush1.bf16.msra.mxu0 %v1428
        %1449 = vmatprep.subr.bf16.mxu0 0
        %1450 = vmatpush1.bf16.msra.mxu0 %v1429
        %1451 = vmatprep.subr.bf16.mxu0 0
        %1452 = vmatpush1.bf16.msra.mxu0 %v1430
        %1453 = vmatprep.subr.bf16.mxu0 0
        %1454 = vmatpush1.bf16.msra.mxu0 %v1431
        %1455 = vmatprep.subr.bf16.mxu0 0
        %1456 = vmatpush1.bf16.msra.mxu0 %v1432
        %1457 = vmatprep.subr.bf16.mxu0 0
        %1458 = vmatpush1.bf16.msra.mxu0 0
        %1459 = vmatprep.subr.bf16.mxu0 0
        %1460 = vmatpush1.bf16.msra.mxu0 0
        %1461 = vmatprep.subr.bf16.mxu0 0
        %1462 = vmatpush1.bf16.msra.mxu0 0
        %1463 = vmatprep.subr.bf16.mxu0 0
        %1464 = vmatpush1.bf16.msra.mxu0 0
        %1465 = vmatprep.subr.bf16.mxu0 0
        %1466 = vmatpush1.bf16.msra.mxu0 0
        %1467 = vmatprep.subr.bf16.mxu0 0
        %1468 = vmatpush1.bf16.msra.mxu0 0
        %1469 = vmatprep.subr.bf16.mxu0 0
        %1470 = vmatpush1.bf16.msra.mxu0 0
        %1471 = vmatprep.subr.bf16.mxu0 0
        %1472 = vmatpush1.bf16.msra.mxu0 0
        %1473 = vmatprep.mubr.bf16.mxu0 0
        %1474 = vmatmul.mubr.bf16.gmra.mrb[0].mxu0 %v879
        %v1475 = vpop.f32.mrb[0].mxu0
        %v1476 = vadd.f32 0.0, %v1475
        %v1477 = vpop.f32.mrb[0].mxu0
        %v1478 = vpop.f32.mrb[0].mxu0
        %v1479 = vadd.f32 0.0, %v1478
        %v1480 = vpop.f32.mrb[0].mxu0
        %1481 = vmatprep.mubr.bf16.mxu0 0
        %1482 = vmatmul.mubr.bf16.gmra.mrb[0].mxu0 %v880
        %v1483 = vpop.f32.mrb[0].mxu0
        %v1484 = vadd.f32 0.0, %v1483
        %v1485 = vpop.f32.mrb[0].mxu0
        %v1486 = vpop.f32.mrb[0].mxu0
        %v1487 = vadd.f32 0.0, %v1486
        %v1488 = vpop.f32.mrb[0].mxu0
        %1489 = vmatprep.mubr.bf16.mxu0 0
        %1490 = vmatmul.mubr.bf16.gmra.mrb[0].mxu0 %v881
        %v1491 = vpop.f32.mrb[0].mxu0
        %v1492 = vadd.f32 0.0, %v1491
        %v1493 = vpop.f32.mrb[0].mxu0
        %v1494 = vpop.f32.mrb[0].mxu0
        %v1495 = vadd.f32 0.0, %v1494
        %v1496 = vpop.f32.mrb[0].mxu0
        %1497 = vmatprep.mubr.bf16.mxu0 0
        %1498 = vmatmul.mubr.bf16.gmra.mrb[0].mxu0 %v882
        %v1499 = vpop.f32.mrb[0].mxu0
        %v1500 = vadd.f32 0.0, %v1499
        %v1501 = vpop.f32.mrb[0].mxu0
        %v1502 = vpop.f32.mrb[0].mxu0
        %v1503 = vadd.f32 0.0, %v1502
        %v1504 = vpop.f32.mrb[0].mxu0
        %1505 = vmatprep.mubr.bf16.mxu0 0
        %1506 = vmatmul.mubr.bf16.gmra.mrb[0].mxu0 %v883
        %v1507 = vpop.f32.mrb[0].mxu0
        %v1508 = vadd.f32 0.0, %v1507
        %v1509 = vpop.f32.mrb[0].mxu0
        %v1510 = vpop.f32.mrb[0].mxu0
        %v1511 = vadd.f32 0.0, %v1510
        %v1512 = vpop.f32.mrb[0].mxu0
        %1513 = vmatprep.mubr.bf16.mxu0 0
        %1514 = vmatmul.mubr.bf16.gmra.mrb[0].mxu0 %v884
        %v1515 = vpop.f32.mrb[0].mxu0
        %v1516 = vadd.f32 0.0, %v1515
        %v1517 = vpop.f32.mrb[0].mxu0
        %v1518 = vpop.f32.mrb[0].mxu0
        %v1519 = vadd.f32 0.0, %v1518
        %v1520 = vpop.f32.mrb[0].mxu0
        %1521 = vmatprep.mubr.bf16.mxu0 0
        %1522 = vmatmul.mubr.bf16.gmra.mrb[0].mxu0 %v885
        %v1523 = vpop.f32.mrb[0].mxu0
        %v1524 = vadd.f32 0.0, %v1523
        %v1525 = vpop.f32.mrb[0].mxu0
        %v1526 = vpop.f32.mrb[0].mxu0
        %v1527 = vadd.f32 0.0, %v1526
        %v1528 = vpop.f32.mrb[0].mxu0
        %1529 = vmatprep.mubr.bf16.mxu0 0
        %1530 = vmatmul.mubr.bf16.gmra.mrb[0].mxu0 %v886
        %v1531 = vpop.f32.mrb[0].mxu0
        %v1532 = vadd.f32 0.0, %v1531
        %v1533 = vpop.f32.mrb[0].mxu0
        %v1534 = vpop.f32.mrb[0].mxu0
        %v1535 = vadd.f32 0.0, %v1534
        %v1536 = vpop.f32.mrb[0].mxu0
        %1537 = vmatprep.mubr.bf16.mxu0 0
        %1538 = vmatmul.mubr.bf16.gmra.mrb[0].mxu0 %v887
        %v1539 = vpop.f32.mrb[0].mxu0
        %v1540 = vadd.f32 0.0, %v1539
        %v1541 = vpop.f32.mrb[0].mxu0
        %v1542 = vpop.f32.mrb[0].mxu0
        %v1543 = vadd.f32 0.0, %v1542
        %v1544 = vpop.f32.mrb[0].mxu0
        %1545 = vmatprep.mubr.bf16.mxu0 0
        %1546 = vmatmul.mubr.bf16.gmra.mrb[0].mxu0 %v888
        %v1547 = vpop.f32.mrb[0].mxu0
        %v1548 = vadd.f32 0.0, %v1547
        %v1549 = vpop.f32.mrb[0].mxu0
        %v1550 = vpop.f32.mrb[0].mxu0
        %v1551 = vadd.f32 0.0, %v1550
        %v1552 = vpop.f32.mrb[0].mxu0
        %1553 = vmatprep.mubr.bf16.mxu0 0
        %1554 = vmatmul.mubr.bf16.gmra.mrb[0].mxu0 %v889
        %v1555 = vpop.f32.mrb[0].mxu0
        %v1556 = vadd.f32 0.0, %v1555
        %v1557 = vpop.f32.mrb[0].mxu0
        %v1558 = vpop.f32.mrb[0].mxu0
        %v1559 = vadd.f32 0.0, %v1558
        %v1560 = vpop.f32.mrb[0].mxu0
        %1561 = vmatprep.mubr.bf16.mxu0 0
        %1562 = vmatmul.mubr.bf16.gmra.mrb[0].mxu0 %v890
        %v1563 = vpop.f32.mrb[0].mxu0
        %v1564 = vadd.f32 0.0, %v1563
        %v1565 = vpop.f32.mrb[0].mxu0
        %v1566 = vpop.f32.mrb[0].mxu0
        %v1567 = vadd.f32 0.0, %v1566
        %v1568 = vpop.f32.mrb[0].mxu0
        %1569 = vmatprep.mubr.bf16.mxu0 0
        %1570 = vmatmul.mubr.bf16.gmra.mrb[0].mxu0 %v891
        %v1571 = vpop.f32.mrb[0].mxu0
        %v1572 = vadd.f32 0.0, %v1571
        %v1573 = vpop.f32.mrb[0].mxu0
        %v1574 = vpop.f32.mrb[0].mxu0
        %v1575 = vadd.f32 0.0, %v1574
        %v1576 = vpop.f32.mrb[0].mxu0
        %1577 = vmatprep.mubr.bf16.mxu0 0
        %1578 = vmatmul.mubr.bf16.gmra.mrb[0].mxu0 %v892
        %v1579 = vpop.f32.mrb[0].mxu0
        %v1580 = vadd.f32 0.0, %v1579
        %v1581 = vpop.f32.mrb[0].mxu0
        %v1582 = vpop.f32.mrb[0].mxu0
        %v1583 = vadd.f32 0.0, %v1582
        %v1584 = vpop.f32.mrb[0].mxu0
        %1585 = vmatprep.mubr.bf16.mxu0 0
        %1586 = vmatmul.mubr.bf16.gmra.mrb[0].mxu0 %v893
        %v1587 = vpop.f32.mrb[0].mxu0
        %v1588 = vadd.f32 0.0, %v1587
        %v1589 = vpop.f32.mrb[0].mxu0
        %v1590 = vpop.f32.mrb[0].mxu0
        %v1591 = vadd.f32 0.0, %v1590
        %v1592 = vpop.f32.mrb[0].mxu0
        %1593 = vmatprep.mubr.bf16.mxu0 0
        %1594 = vmatmul.mubr.bf16.gmra.mrb[0].mxu0 %v894
        %v1595 = vpop.f32.mrb[0].mxu0
        %v1596 = vadd.f32 0.0, %v1595
        %v1597 = vpop.f32.mrb[0].mxu0
        %v1598 = vpop.f32.mrb[0].mxu0
        %v1599 = vadd.f32 0.0, %v1598
        %v1600 = vpop.f32.mrb[0].mxu0
        %1601 = vdwg.mxu0
        %v1602 = vpack.c.bf16 %v1479, %v1476
        %v1603 = vpack.c.bf16 %v1487, %v1484
        %v1604 = vpack.c.bf16 %v1495, %v1492
        %v1605 = vpack.c.bf16 %v1503, %v1500
        %v1606 = vpack.c.bf16 %v1511, %v1508
        %v1607 = vpack.c.bf16 %v1519, %v1516
        %v1608 = vpack.c.bf16 %v1527, %v1524
        %v1609 = vpack.c.bf16 %v1535, %v1532
        %v1610 = vpack.c.bf16 %v1543, %v1540
        %v1611 = vpack.c.bf16 %v1551, %v1548
        %v1612 = vpack.c.bf16 %v1559, %v1556
        %v1613 = vpack.c.bf16 %v1567, %v1564
        %v1614 = vpack.c.bf16 %v1575, %v1572
        %v1615 = vpack.c.bf16 %v1583, %v1580
        %v1616 = vpack.c.bf16 %v1591, %v1588
        %v1617 = vpack.c.bf16 %v1599, %v1596
        %v1618 = vmul.bf16 %v1120, %v1361
        %v1619 = vmul.bf16 %v1121, %v1362
        %v1620 = vmul.bf16 %v1122, %v1363
        %v1621 = vmul.bf16 %v1123, %v1364
        %v1622 = vmul.bf16 %v1124, %v1365
        %v1623 = vmul.bf16 %v1125, %v1366
        %v1624 = vmul.bf16 %v1126, %v1367
        %v1625 = vmul.bf16 %v1127, %v1368
        %v1626 = vmul.bf16 %v1128, %v1369
        %v1627 = vmul.bf16 %v1129, %v1370
        %v1628 = vmul.bf16 %v1130, %v1371
        %v1629 = vmul.bf16 %v1131, %v1372
        %v1630 = vmul.bf16 %v1132, %v1373
        %v1631 = vmul.bf16 %v1133, %v1374
        %v1632 = vmul.bf16 %v1134, %v1375
        %v1633 = vmul.bf16 %v1135, %v1376
        %v1634 = vld [vmem:[%s5] sm:$0xf]
        %v1635 = vld [vmem:[%s5 + $0x4] sm:$0xf]
        %v1636 = vld [vmem:[%s5 + $0x8] sm:$0xf]
        %v1637 = vld [vmem:[%s5 + $0xc] sm:$0xf]
        %v1638 = vld [vmem:[%s5 + $0x10] sm:$0xf]
        %v1639 = vld [vmem:[%s5 + $0x14] sm:$0xf]
        %v1640 = vld [vmem:[%s5 + $0x18] sm:$0xf]
        %v1641 = vld [vmem:[%s5 + $0x1c] sm:$0xf]
        %v1642 = vld [vmem:[%s5 + $0x20] sm:$0xf]
        %v1643 = vld [vmem:[%s5 + $0x24] sm:$0xf]
        %v1644 = vld [vmem:[%s5 + $0x28] sm:$0xf]
        %v1645 = vld [vmem:[%s5 + $0x2c] sm:$0xf]
        %v1646 = vld [vmem:[%s5 + $0x30] sm:$0xf]
        %v1647 = vld [vmem:[%s5 + $0x34] sm:$0xf]
        %v1648 = vld [vmem:[%s5 + $0x38] sm:$0xf]
        %v1649 = vld [vmem:[%s5 + $0x3c] sm:$0xf]
        %v1666 = vunpack.c.l.b16 %v1634
        %v1667 = vunpack.c.l.b16 %v1635
        %v1668 = vunpack.c.l.b16 %v1636
        %v1669 = vunpack.c.l.b16 %v1637
        %v1670 = vunpack.c.l.b16 %v1638
        %v1671 = vunpack.c.l.b16 %v1639
        %v1672 = vunpack.c.l.b16 %v1640
        %v1673 = vunpack.c.l.b16 %v1641
        %v1674 = vunpack.c.l.b16 %v1642
        %v1675 = vunpack.c.l.b16 %v1643
        %v1676 = vunpack.c.l.b16 %v1644
        %v1677 = vunpack.c.l.b16 %v1645
        %v1678 = vunpack.c.l.b16 %v1646
        %v1679 = vunpack.c.l.b16 %v1647
        %v1680 = vunpack.c.l.b16 %v1648
        %v1681 = vunpack.c.l.b16 %v1649
        %v1682 = vpack.c.b16 %v1667, %v1666
        %v1683 = vpack.c.b16 %v1669, %v1668
        %v1684 = vpack.c.b16 %v1671, %v1670
        %v1685 = vpack.c.b16 %v1673, %v1672
        %v1686 = vpack.c.b16 %v1675, %v1674
        %v1687 = vpack.c.b16 %v1677, %v1676
        %v1688 = vpack.c.b16 %v1679, %v1678
        %v1689 = vpack.c.b16 %v1681, %v1680
        %1698 = vmatprep.subr.bf16.mxu0 0
        %1699 = vmatpush1.bf16.msra.mxu0 %v1682
        %1700 = vmatprep.subr.bf16.mxu0 0
        %1701 = vmatpush1.bf16.msra.mxu0 %v1683
        %1702 = vmatprep.subr.bf16.mxu0 0
        %1703 = vmatpush1.bf16.msra.mxu0 %v1684
        %1704 = vmatprep.subr.bf16.mxu0 0
        %1705 = vmatpush1.bf16.msra.mxu0 %v1685
        %1706 = vmatprep.subr.bf16.mxu0 0
        %1707 = vmatpush1.bf16.msra.mxu0 %v1686
        %1708 = vmatprep.subr.bf16.mxu0 0
        %1709 = vmatpush1.bf16.msra.mxu0 %v1687
        %1710 = vmatprep.subr.bf16.mxu0 0
        %1711 = vmatpush1.bf16.msra.mxu0 %v1688
        %1712 = vmatprep.subr.bf16.mxu0 0
        %1713 = vmatpush1.bf16.msra.mxu0 %v1689
        %1714 = vmatprep.subr.bf16.mxu0 0
        %1715 = vmatpush1.bf16.msra.mxu0 0
        %1716 = vmatprep.subr.bf16.mxu0 0
        %1717 = vmatpush1.bf16.msra.mxu0 0
        %1718 = vmatprep.subr.bf16.mxu0 0
        %1719 = vmatpush1.bf16.msra.mxu0 0
        %1720 = vmatprep.subr.bf16.mxu0 0
        %1721 = vmatpush1.bf16.msra.mxu0 0
        %1722 = vmatprep.subr.bf16.mxu0 0
        %1723 = vmatpush1.bf16.msra.mxu0 0
        %1724 = vmatprep.subr.bf16.mxu0 0
        %1725 = vmatpush1.bf16.msra.mxu0 0
        %1726 = vmatprep.subr.bf16.mxu0 0
        %1727 = vmatpush1.bf16.msra.mxu0 0
        %1728 = vmatprep.subr.bf16.mxu0 0
        %1729 = vmatpush1.bf16.msra.mxu0 0
        %1730 = vmatprep.mubr.bf16.mxu0 0
        %1731 = vmatmul.mubr.bf16.gmra.mrb[0].mxu0 %v1618
        %v1732 = vpop.f32.mrb[0].mxu0
        %v1733 = vadd.f32 0.0, %v1732
        %v1734 = vpop.f32.mrb[0].mxu0
        %v1735 = vpop.f32.mrb[0].mxu0
        %v1736 = vadd.f32 0.0, %v1735
        %v1737 = vpop.f32.mrb[0].mxu0
        %1738 = vmatprep.mubr.bf16.mxu0 0
        %1739 = vmatmul.mubr.bf16.gmra.mrb[0].mxu0 %v1619
        %v1740 = vpop.f32.mrb[0].mxu0
        %v1741 = vadd.f32 0.0, %v1740
        %v1742 = vpop.f32.mrb[0].mxu0
        %v1743 = vpop.f32.mrb[0].mxu0
        %v1744 = vadd.f32 0.0, %v1743
        %v1745 = vpop.f32.mrb[0].mxu0
        %1746 = vmatprep.mubr.bf16.mxu0 0
        %1747 = vmatmul.mubr.bf16.gmra.mrb[0].mxu0 %v1620
        %v1748 = vpop.f32.mrb[0].mxu0
        %v1749 = vadd.f32 0.0, %v1748
        %v1750 = vpop.f32.mrb[0].mxu0
        %v1751 = vpop.f32.mrb[0].mxu0
        %v1752 = vadd.f32 0.0, %v1751
        %v1753 = vpop.f32.mrb[0].mxu0
        %1754 = vmatprep.mubr.bf16.mxu0 0
        %1755 = vmatmul.mubr.bf16.gmra.mrb[0].mxu0 %v1621
        %v1756 = vpop.f32.mrb[0].mxu0
        %v1757 = vadd.f32 0.0, %v1756
        %v1758 = vpop.f32.mrb[0].mxu0
        %v1759 = vpop.f32.mrb[0].mxu0
        %v1760 = vadd.f32 0.0, %v1759
        %v1761 = vpop.f32.mrb[0].mxu0
        %1762 = vmatprep.mubr.bf16.mxu0 0
        %1763 = vmatmul.mubr.bf16.gmra.mrb[0].mxu0 %v1622
        %v1764 = vpop.f32.mrb[0].mxu0
        %v1765 = vadd.f32 0.0, %v1764
        %v1766 = vpop.f32.mrb[0].mxu0
        %v1767 = vpop.f32.mrb[0].mxu0
        %v1768 = vadd.f32 0.0, %v1767
        %v1769 = vpop.f32.mrb[0].mxu0
        %1770 = vmatprep.mubr.bf16.mxu0 0
        %1771 = vmatmul.mubr.bf16.gmra.mrb[0].mxu0 %v1623
        %v1772 = vpop.f32.mrb[0].mxu0
        %v1773 = vadd.f32 0.0, %v1772
        %v1774 = vpop.f32.mrb[0].mxu0
        %v1775 = vpop.f32.mrb[0].mxu0
        %v1776 = vadd.f32 0.0, %v1775
        %v1777 = vpop.f32.mrb[0].mxu0
        %1778 = vmatprep.mubr.bf16.mxu0 0
        %1779 = vmatmul.mubr.bf16.gmra.mrb[0].mxu0 %v1624
        %v1780 = vpop.f32.mrb[0].mxu0
        %v1781 = vadd.f32 0.0, %v1780
        %v1782 = vpop.f32.mrb[0].mxu0
        %v1783 = vpop.f32.mrb[0].mxu0
        %v1784 = vadd.f32 0.0, %v1783
        %v1785 = vpop.f32.mrb[0].mxu0
        %1786 = vmatprep.mubr.bf16.mxu0 0
        %1787 = vmatmul.mubr.bf16.gmra.mrb[0].mxu0 %v1625
        %v1788 = vpop.f32.mrb[0].mxu0
        %v1789 = vadd.f32 0.0, %v1788
        %v1790 = vpop.f32.mrb[0].mxu0
        %v1791 = vpop.f32.mrb[0].mxu0
        %v1792 = vadd.f32 0.0, %v1791
        %v1793 = vpop.f32.mrb[0].mxu0
        %1794 = vmatprep.mubr.bf16.mxu0 0
        %1795 = vmatmul.mubr.bf16.gmra.mrb[0].mxu0 %v1626
        %v1796 = vpop.f32.mrb[0].mxu0
        %v1797 = vadd.f32 0.0, %v1796
        %v1798 = vpop.f32.mrb[0].mxu0
        %v1799 = vpop.f32.mrb[0].mxu0
        %v1800 = vadd.f32 0.0, %v1799
        %v1801 = vpop.f32.mrb[0].mxu0
        %1802 = vmatprep.mubr.bf16.mxu0 0
        %1803 = vmatmul.mubr.bf16.gmra.mrb[0].mxu0 %v1627
        %v1804 = vpop.f32.mrb[0].mxu0
        %v1805 = vadd.f32 0.0, %v1804
        %v1806 = vpop.f32.mrb[0].mxu0
        %v1807 = vpop.f32.mrb[0].mxu0
        %v1808 = vadd.f32 0.0, %v1807
        %v1809 = vpop.f32.mrb[0].mxu0
        %1810 = vmatprep.mubr.bf16.mxu0 0
        %1811 = vmatmul.mubr.bf16.gmra.mrb[0].mxu0 %v1628
        %v1812 = vpop.f32.mrb[0].mxu0
        %v1813 = vadd.f32 0.0, %v1812
        %v1814 = vpop.f32.mrb[0].mxu0
        %v1815 = vpop.f32.mrb[0].mxu0
        %v1816 = vadd.f32 0.0, %v1815
        %v1817 = vpop.f32.mrb[0].mxu0
        %1818 = vmatprep.mubr.bf16.mxu0 0
        %1819 = vmatmul.mubr.bf16.gmra.mrb[0].mxu0 %v1629
        %v1820 = vpop.f32.mrb[0].mxu0
        %v1821 = vadd.f32 0.0, %v1820
        %v1822 = vpop.f32.mrb[0].mxu0
        %v1823 = vpop.f32.mrb[0].mxu0
        %v1824 = vadd.f32 0.0, %v1823
        %v1825 = vpop.f32.mrb[0].mxu0
        %1826 = vmatprep.mubr.bf16.mxu0 0
        %1827 = vmatmul.mubr.bf16.gmra.mrb[0].mxu0 %v1630
        %v1828 = vpop.f32.mrb[0].mxu0
        %v1829 = vadd.f32 0.0, %v1828
        %v1830 = vpop.f32.mrb[0].mxu0
        %v1831 = vpop.f32.mrb[0].mxu0
        %v1832 = vadd.f32 0.0, %v1831
        %v1833 = vpop.f32.mrb[0].mxu0
        %1834 = vmatprep.mubr.bf16.mxu0 0
        %1835 = vmatmul.mubr.bf16.gmra.mrb[0].mxu0 %v1631
        %v1836 = vpop.f32.mrb[0].mxu0
        %v1837 = vadd.f32 0.0, %v1836
        %v1838 = vpop.f32.mrb[0].mxu0
        %v1839 = vpop.f32.mrb[0].mxu0
        %v1840 = vadd.f32 0.0, %v1839
        %v1841 = vpop.f32.mrb[0].mxu0
        %1842 = vmatprep.mubr.bf16.mxu0 0
        %1843 = vmatmul.mubr.bf16.gmra.mrb[0].mxu0 %v1632
        %v1844 = vpop.f32.mrb[0].mxu0
        %v1845 = vadd.f32 0.0, %v1844
        %v1846 = vpop.f32.mrb[0].mxu0
        %v1847 = vpop.f32.mrb[0].mxu0
        %v1848 = vadd.f32 0.0, %v1847
        %v1849 = vpop.f32.mrb[0].mxu0
        %1850 = vmatprep.mubr.bf16.mxu0 0
        %1851 = vmatmul.mubr.bf16.gmra.mrb[0].mxu0 %v1633
        %v1852 = vpop.f32.mrb[0].mxu0
        %v1853 = vadd.f32 0.0, %v1852
        %v1854 = vpop.f32.mrb[0].mxu0
        %v1855 = vpop.f32.mrb[0].mxu0
        %v1856 = vadd.f32 0.0, %v1855
        %v1857 = vpop.f32.mrb[0].mxu0
        %1858 = vdwg.mxu0
        %v1859 = vld [vmem:[%s390] sm:$0xff]
        %v1860 = vld [vmem:[%s390 + $0x8] sm:$0xff]
        %v1861 = vld [vmem:[%s390 + $0x10] sm:$0xff]
        %v1862 = vld [vmem:[%s390 + $0x18] sm:$0xff]
        %v1863 = vld [vmem:[%s390 + $0x20] sm:$0xff]
        %v1864 = vld [vmem:[%s390 + $0x28] sm:$0xff]
        %v1865 = vld [vmem:[%s390 + $0x30] sm:$0xff]
        %v1866 = vld [vmem:[%s390 + $0x38] sm:$0xff]
        %v1867 = vld [vmem:[%s390 + $0x40] sm:$0xff]
        %v1868 = vld [vmem:[%s390 + $0x48] sm:$0xff]
        %v1869 = vld [vmem:[%s390 + $0x50] sm:$0xff]
        %v1870 = vld [vmem:[%s390 + $0x58] sm:$0xff]
        %v1871 = vld [vmem:[%s390 + $0x60] sm:$0xff]
        %v1872 = vld [vmem:[%s390 + $0x68] sm:$0xff]
        %v1873 = vld [vmem:[%s390 + $0x70] sm:$0xff]
        %v1874 = vld [vmem:[%s390 + $0x78] sm:$0xff]
        %v1875 = vld [vmem:[%s390 + $0x80] sm:$0xff]
        %v1876 = vld [vmem:[%s390 + $0x88] sm:$0xff]
        %v1877 = vld [vmem:[%s390 + $0x90] sm:$0xff]
        %v1878 = vld [vmem:[%s390 + $0x98] sm:$0xff]
        %v1879 = vld [vmem:[%s390 + $0xa0] sm:$0xff]
        %v1880 = vld [vmem:[%s390 + $0xa8] sm:$0xff]
        %v1881 = vld [vmem:[%s390 + $0xb0] sm:$0xff]
        %v1882 = vld [vmem:[%s390 + $0xb8] sm:$0xff]
        %v1883 = vld [vmem:[%s390 + $0xc0] sm:$0xff]
        %v1884 = vld [vmem:[%s390 + $0xc8] sm:$0xff]
        %v1885 = vld [vmem:[%s390 + $0xd0] sm:$0xff]
        %v1886 = vld [vmem:[%s390 + $0xd8] sm:$0xff]
        %v1887 = vld [vmem:[%s390 + $0xe0] sm:$0xff]
        %v1888 = vld [vmem:[%s390 + $0xe8] sm:$0xff]
        %v1889 = vld [vmem:[%s390 + $0xf0] sm:$0xff]
        %v1890 = vld [vmem:[%s390 + $0xf8] sm:$0xff]
        %1892 = vset.pattern.permute.xlu0 0
        %1893 = vperm.xlu0 %1892, %v1859
        %v1894 = vpop.permute.xlu0 %1893
        %1897 = vset.pattern.permute.xlu0 0
        %1898 = vperm.xlu0 %1897, %v1860
        %v1899 = vpop.permute.xlu0 %1898
        %1902 = vset.pattern.permute.xlu0 0
        %1903 = vperm.xlu0 %1902, %v1861
        %v1904 = vpop.permute.xlu0 %1903
        %1907 = vset.pattern.permute.xlu0 0
        %1908 = vperm.xlu0 %1907, %v1862
        %v1909 = vpop.permute.xlu0 %1908
        %1912 = vset.pattern.permute.xlu0 0
        %1913 = vperm.xlu0 %1912, %v1863
        %v1914 = vpop.permute.xlu0 %1913
        %1917 = vset.pattern.permute.xlu0 0
        %1918 = vperm.xlu0 %1917, %v1864
        %v1919 = vpop.permute.xlu0 %1918
        %1922 = vset.pattern.permute.xlu0 0
        %1923 = vperm.xlu0 %1922, %v1865
        %v1924 = vpop.permute.xlu0 %1923
        %1927 = vset.pattern.permute.xlu0 0
        %1928 = vperm.xlu0 %1927, %v1866
        %v1929 = vpop.permute.xlu0 %1928
        %1932 = vset.pattern.permute.xlu0 0
        %1933 = vperm.xlu0 %1932, %v1867
        %v1934 = vpop.permute.xlu0 %1933
        %1937 = vset.pattern.permute.xlu0 0
        %1938 = vperm.xlu0 %1937, %v1868
        %v1939 = vpop.permute.xlu0 %1938
        %1942 = vset.pattern.permute.xlu0 0
        %1943 = vperm.xlu0 %1942, %v1869
        %v1944 = vpop.permute.xlu0 %1943
        %1947 = vset.pattern.permute.xlu0 0
        %1948 = vperm.xlu0 %1947, %v1870
        %v1949 = vpop.permute.xlu0 %1948
        %1952 = vset.pattern.permute.xlu0 0
        %1953 = vperm.xlu0 %1952, %v1871
        %v1954 = vpop.permute.xlu0 %1953
        %1957 = vset.pattern.permute.xlu0 0
        %1958 = vperm.xlu0 %1957, %v1872
        %v1959 = vpop.permute.xlu0 %1958
        %1962 = vset.pattern.permute.xlu0 0
        %1963 = vperm.xlu0 %1962, %v1873
        %v1964 = vpop.permute.xlu0 %1963
        %1967 = vset.pattern.permute.xlu0 0
        %1968 = vperm.xlu0 %1967, %v1874
        %v1969 = vpop.permute.xlu0 %1968
        %1972 = vset.pattern.permute.xlu0 0
        %1973 = vperm.xlu0 %1972, %v1875
        %v1974 = vpop.permute.xlu0 %1973
        %1977 = vset.pattern.permute.xlu0 0
        %1978 = vperm.xlu0 %1977, %v1876
        %v1979 = vpop.permute.xlu0 %1978
        %1982 = vset.pattern.permute.xlu0 0
        %1983 = vperm.xlu0 %1982, %v1877
        %v1984 = vpop.permute.xlu0 %1983
        %1987 = vset.pattern.permute.xlu0 0
        %1988 = vperm.xlu0 %1987, %v1878
        %v1989 = vpop.permute.xlu0 %1988
        %1992 = vset.pattern.permute.xlu0 0
        %1993 = vperm.xlu0 %1992, %v1879
        %v1994 = vpop.permute.xlu0 %1993
        %1997 = vset.pattern.permute.xlu0 0
        %1998 = vperm.xlu0 %1997, %v1880
        %v1999 = vpop.permute.xlu0 %1998
        %2002 = vset.pattern.permute.xlu0 0
        %2003 = vperm.xlu0 %2002, %v1881
        %v2004 = vpop.permute.xlu0 %2003
        %2007 = vset.pattern.permute.xlu0 0
        %2008 = vperm.xlu0 %2007, %v1882
        %v2009 = vpop.permute.xlu0 %2008
        %2012 = vset.pattern.permute.xlu0 0
        %2013 = vperm.xlu0 %2012, %v1883
        %v2014 = vpop.permute.xlu0 %2013
        %2017 = vset.pattern.permute.xlu0 0
        %2018 = vperm.xlu0 %2017, %v1884
        %v2019 = vpop.permute.xlu0 %2018
        %2022 = vset.pattern.permute.xlu0 0
        %2023 = vperm.xlu0 %2022, %v1885
        %v2024 = vpop.permute.xlu0 %2023
        %2027 = vset.pattern.permute.xlu0 0
        %2028 = vperm.xlu0 %2027, %v1886
        %v2029 = vpop.permute.xlu0 %2028
        %2032 = vset.pattern.permute.xlu0 0
        %2033 = vperm.xlu0 %2032, %v1887
        %v2034 = vpop.permute.xlu0 %2033
        %2037 = vset.pattern.permute.xlu0 0
        %2038 = vperm.xlu0 %2037, %v1888
        %v2039 = vpop.permute.xlu0 %2038
        %2042 = vset.pattern.permute.xlu0 0
        %2043 = vperm.xlu0 %2042, %v1889
        %v2044 = vpop.permute.xlu0 %2043
        %2047 = vset.pattern.permute.xlu0 0
        %2048 = vperm.xlu0 %2047, %v1890
        %v2049 = vpop.permute.xlu0 %2048
        %v2051 = vmul.f32 %v1733, %v1894
        %v2052 = vmul.f32 %v1736, %v1899
        %v2053 = vmul.f32 %v1741, %v1904
        %v2054 = vmul.f32 %v1744, %v1909
        %v2055 = vmul.f32 %v1749, %v1914
        %v2056 = vmul.f32 %v1752, %v1919
        %v2057 = vmul.f32 %v1757, %v1924
        %v2058 = vmul.f32 %v1760, %v1929
        %v2059 = vmul.f32 %v1765, %v1934
        %v2060 = vmul.f32 %v1768, %v1939
        %v2061 = vmul.f32 %v1773, %v1944
        %v2062 = vmul.f32 %v1776, %v1949
        %v2063 = vmul.f32 %v1781, %v1954
        %v2064 = vmul.f32 %v1784, %v1959
        %v2065 = vmul.f32 %v1789, %v1964
        %v2066 = vmul.f32 %v1792, %v1969
        %v2067 = vmul.f32 %v1797, %v1974
        %v2068 = vmul.f32 %v1800, %v1979
        %v2069 = vmul.f32 %v1805, %v1984
        %v2070 = vmul.f32 %v1808, %v1989
        %v2071 = vmul.f32 %v1813, %v1994
        %v2072 = vmul.f32 %v1816, %v1999
        %v2073 = vmul.f32 %v1821, %v2004
        %v2074 = vmul.f32 %v1824, %v2009
        %v2075 = vmul.f32 %v1829, %v2014
        %v2076 = vmul.f32 %v1832, %v2019
        %v2077 = vmul.f32 %v1837, %v2024
        %v2078 = vmul.f32 %v1840, %v2029
        %v2079 = vmul.f32 %v1845, %v2034
        %v2080 = vmul.f32 %v1848, %v2039
        %v2081 = vmul.f32 %v1853, %v2044
        %v2082 = vmul.f32 %v1856, %v2049
        %v2083 = vunpack.c.l.bf16 %v1602
        %v2084 = vunpack.c.h.bf16 %v1602
        %v2085 = vunpack.c.l.bf16 %v1603
        %v2086 = vunpack.c.h.bf16 %v1603
        %v2087 = vunpack.c.l.bf16 %v1604
        %v2088 = vunpack.c.h.bf16 %v1604
        %v2089 = vunpack.c.l.bf16 %v1605
        %v2090 = vunpack.c.h.bf16 %v1605
        %v2091 = vunpack.c.l.bf16 %v1606
        %v2092 = vunpack.c.h.bf16 %v1606
        %v2093 = vunpack.c.l.bf16 %v1607
        %v2094 = vunpack.c.h.bf16 %v1607
        %v2095 = vunpack.c.l.bf16 %v1608
        %v2096 = vunpack.c.h.bf16 %v1608
        %v2097 = vunpack.c.l.bf16 %v1609
        %v2098 = vunpack.c.h.bf16 %v1609
        %v2099 = vunpack.c.l.bf16 %v1610
        %v2100 = vunpack.c.h.bf16 %v1610
        %v2101 = vunpack.c.l.bf16 %v1611
        %v2102 = vunpack.c.h.bf16 %v1611
        %v2103 = vunpack.c.l.bf16 %v1612
        %v2104 = vunpack.c.h.bf16 %v1612
        %v2105 = vunpack.c.l.bf16 %v1613
        %v2106 = vunpack.c.h.bf16 %v1613
        %v2107 = vunpack.c.l.bf16 %v1614
        %v2108 = vunpack.c.h.bf16 %v1614
        %v2109 = vunpack.c.l.bf16 %v1615
        %v2110 = vunpack.c.h.bf16 %v1615
        %v2111 = vunpack.c.l.bf16 %v1616
        %v2112 = vunpack.c.h.bf16 %v1616
        %v2113 = vunpack.c.l.bf16 %v1617
        %v2114 = vunpack.c.h.bf16 %v1617
        %v2115 = vmul.f32 %v2083, %v2051
        %v2116 = vmul.f32 %v2084, %v2052
        %v2117 = vmul.f32 %v2085, %v2053
        %v2118 = vmul.f32 %v2086, %v2054
        %v2119 = vmul.f32 %v2087, %v2055
        %v2120 = vmul.f32 %v2088, %v2056
        %v2121 = vmul.f32 %v2089, %v2057
        %v2122 = vmul.f32 %v2090, %v2058
        %v2123 = vmul.f32 %v2091, %v2059
        %v2124 = vmul.f32 %v2092, %v2060
        %v2125 = vmul.f32 %v2093, %v2061
        %v2126 = vmul.f32 %v2094, %v2062
        %v2127 = vmul.f32 %v2095, %v2063
        %v2128 = vmul.f32 %v2096, %v2064
        %v2129 = vmul.f32 %v2097, %v2065
        %v2130 = vmul.f32 %v2098, %v2066
        %v2131 = vmul.f32 %v2099, %v2067
        %v2132 = vmul.f32 %v2100, %v2068
        %v2133 = vmul.f32 %v2101, %v2069
        %v2134 = vmul.f32 %v2102, %v2070
        %v2135 = vmul.f32 %v2103, %v2071
        %v2136 = vmul.f32 %v2104, %v2072
        %v2137 = vmul.f32 %v2105, %v2073
        %v2138 = vmul.f32 %v2106, %v2074
        %v2139 = vmul.f32 %v2107, %v2075
        %v2140 = vmul.f32 %v2108, %v2076
        %v2141 = vmul.f32 %v2109, %v2077
        %v2142 = vmul.f32 %v2110, %v2078
        %v2143 = vmul.f32 %v2111, %v2079
        %v2144 = vmul.f32 %v2112, %v2080
        %v2145 = vmul.f32 %v2113, %v2081
        %v2146 = vmul.f32 %v2114, %v2082
        %v2147 = vpack.c.bf16 %v2116, %v2115
        %v2148 = vpack.c.bf16 %v2118, %v2117
        %v2149 = vpack.c.bf16 %v2120, %v2119
        %v2150 = vpack.c.bf16 %v2122, %v2121
        %v2151 = vpack.c.bf16 %v2124, %v2123
        %v2152 = vpack.c.bf16 %v2126, %v2125
        %v2153 = vpack.c.bf16 %v2128, %v2127
        %v2154 = vpack.c.bf16 %v2130, %v2129
        %v2155 = vpack.c.bf16 %v2132, %v2131
        %v2156 = vpack.c.bf16 %v2134, %v2133
        %v2157 = vpack.c.bf16 %v2136, %v2135
        %v2158 = vpack.c.bf16 %v2138, %v2137
        %v2159 = vpack.c.bf16 %v2140, %v2139
        %v2160 = vpack.c.bf16 %v2142, %v2141
        %v2161 = vpack.c.bf16 %v2144, %v2143
        %v2162 = vpack.c.bf16 %v2146, %v2145
        %v2163 = vld [vmem:[#allocation2] sm:$0xff]
        %v2164 = vld [vmem:[#allocation2 + $0x8] sm:$0xff]
        %v2165 = vld [vmem:[#allocation2 + $0x10] sm:$0xff]
        %v2166 = vld [vmem:[#allocation2 + $0x18] sm:$0xff]
        %v2167 = vld [vmem:[#allocation2 + $0x20] sm:$0xff]
        %v2168 = vld [vmem:[#allocation2 + $0x28] sm:$0xff]
        %v2169 = vld [vmem:[#allocation2 + $0x30] sm:$0xff]
        %v2170 = vld [vmem:[#allocation2 + $0x38] sm:$0xff]
        %v2171 = vld [vmem:[#allocation2 + $0x40] sm:$0xff]
        %v2172 = vld [vmem:[#allocation2 + $0x48] sm:$0xff]
        %v2173 = vld [vmem:[#allocation2 + $0x50] sm:$0xff]
        %v2174 = vld [vmem:[#allocation2 + $0x58] sm:$0xff]
        %v2175 = vld [vmem:[#allocation2 + $0x60] sm:$0xff]
        %v2176 = vld [vmem:[#allocation2 + $0x68] sm:$0xff]
        %v2177 = vld [vmem:[#allocation2 + $0x70] sm:$0xff]
        %v2178 = vld [vmem:[#allocation2 + $0x78] sm:$0xff]
        %2179 = vxpose.xlu0.c.b16.start [1/8] %v879, 128
        %2180 = vxpose.xlu0.c.b16.cont [2/8] %v880, 128
        %2181 = vxpose.xlu0.c.b16.cont [3/8] %v881, 128
        %2182 = vxpose.xlu0.c.b16.cont [4/8] %v882, 128
        %2183 = vxpose.xlu0.c.b16.cont [5/8] %v883, 128
        %2184 = vxpose.xlu0.c.b16.cont [6/8] %v884, 128
        %2185 = vxpose.xlu0.c.b16.cont [7/8] %v885, 128
        %2186 = vxpose.xlu0.c.b16.end [8/8] %v886, 128
        %v2187 = vpop.trf.xlu0
        %v2188 = vpop.trf.xlu0
        %v2189 = vpop.trf.xlu0
        %v2190 = vpop.trf.xlu0
        %v2191 = vpop.trf.xlu0
        %v2192 = vpop.trf.xlu0
        %v2193 = vpop.trf.xlu0
        %v2194 = vpop.trf.xlu0
        %2195 = vxpose.xlu0.c.b16.start [1/8] %v887, 128
        %2196 = vxpose.xlu0.c.b16.cont [2/8] %v888, 128
        %2197 = vxpose.xlu0.c.b16.cont [3/8] %v889, 128
        %2198 = vxpose.xlu0.c.b16.cont [4/8] %v890, 128
        %2199 = vxpose.xlu0.c.b16.cont [5/8] %v891, 128
        %2200 = vxpose.xlu0.c.b16.cont [6/8] %v892, 128
        %2201 = vxpose.xlu0.c.b16.cont [7/8] %v893, 128
        %2202 = vxpose.xlu0.c.b16.end [8/8] %v894, 128
        %v2203 = vpop.trf.xlu0
        %v2204 = vpop.trf.xlu0
        %v2205 = vpop.trf.xlu0
        %v2206 = vpop.trf.xlu0
        %v2207 = vpop.trf.xlu0
        %v2208 = vpop.trf.xlu0
        %v2209 = vpop.trf.xlu0
        %v2210 = vpop.trf.xlu0
        %2211 = vmatprep.subr.bf16.mxu0 0
        %2212 = vmatpush1.bf16.msra.mxu0 %v2147
        %2213 = vmatprep.subr.bf16.mxu0 0
        %2214 = vmatpush1.bf16.msra.mxu0 %v2148
        %2215 = vmatprep.subr.bf16.mxu0 0
        %2216 = vmatpush1.bf16.msra.mxu0 %v2149
        %2217 = vmatprep.subr.bf16.mxu0 0
        %2218 = vmatpush1.bf16.msra.mxu0 %v2150
        %2219 = vmatprep.subr.bf16.mxu0 0
        %2220 = vmatpush1.bf16.msra.mxu0 %v2151
        %2221 = vmatprep.subr.bf16.mxu0 0
        %2222 = vmatpush1.bf16.msra.mxu0 %v2152
        %2223 = vmatprep.subr.bf16.mxu0 0
        %2224 = vmatpush1.bf16.msra.mxu0 %v2153
        %2225 = vmatprep.subr.bf16.mxu0 0
        %2226 = vmatpush1.bf16.msra.mxu0 %v2154
        %2227 = vmatprep.subr.bf16.mxu0 0
        %2228 = vmatpush1.bf16.msra.mxu0 %v2155
        %2229 = vmatprep.subr.bf16.mxu0 0
        %2230 = vmatpush1.bf16.msra.mxu0 %v2156
        %2231 = vmatprep.subr.bf16.mxu0 0
        %2232 = vmatpush1.bf16.msra.mxu0 %v2157
        %2233 = vmatprep.subr.bf16.mxu0 0
        %2234 = vmatpush1.bf16.msra.mxu0 %v2158
        %2235 = vmatprep.subr.bf16.mxu0 0
        %2236 = vmatpush1.bf16.msra.mxu0 %v2159
        %2237 = vmatprep.subr.bf16.mxu0 0
        %2238 = vmatpush1.bf16.msra.mxu0 %v2160
        %2239 = vmatprep.subr.bf16.mxu0 0
        %2240 = vmatpush1.bf16.msra.mxu0 %v2161
        %2241 = vmatprep.subr.bf16.mxu0 0
        %2242 = vmatpush1.bf16.msra.mxu0 %v2162
        %2243 = vmatprep.mubr.bf16.mxu0 %v2203
        %2244 = vmatmul.mubr.bf16.gmra.mrb[0].mxu0 %v2187
        %v2245 = vpop.f32.mrb[0].mxu0
        %v2246 = vadd.f32 0.0, %v2245
        %v2247 = vpop.f32.mrb[0].mxu0
        %v2248 = vpop.f32.mrb[0].mxu0
        %v2249 = vadd.f32 0.0, %v2248
        %v2250 = vpop.f32.mrb[0].mxu0
        %2251 = vmatprep.mubr.bf16.mxu0 %v2204
        %2252 = vmatmul.mubr.bf16.gmra.mrb[0].mxu0 %v2188
        %v2253 = vpop.f32.mrb[0].mxu0
        %v2254 = vadd.f32 0.0, %v2253
        %v2255 = vpop.f32.mrb[0].mxu0
        %v2256 = vpop.f32.mrb[0].mxu0
        %v2257 = vadd.f32 0.0, %v2256
        %v2258 = vpop.f32.mrb[0].mxu0
        %2259 = vmatprep.mubr.bf16.mxu0 %v2205
        %2260 = vmatmul.mubr.bf16.gmra.mrb[0].mxu0 %v2189
        %v2261 = vpop.f32.mrb[0].mxu0
        %v2262 = vadd.f32 0.0, %v2261
        %v2263 = vpop.f32.mrb[0].mxu0
        %v2264 = vpop.f32.mrb[0].mxu0
        %v2265 = vadd.f32 0.0, %v2264
        %v2266 = vpop.f32.mrb[0].mxu0
        %2267 = vmatprep.mubr.bf16.mxu0 %v2206
        %2268 = vmatmul.mubr.bf16.gmra.mrb[0].mxu0 %v2190
        %v2269 = vpop.f32.mrb[0].mxu0
        %v2270 = vadd.f32 0.0, %v2269
        %v2271 = vpop.f32.mrb[0].mxu0
        %v2272 = vpop.f32.mrb[0].mxu0
        %v2273 = vadd.f32 0.0, %v2272
        %v2274 = vpop.f32.mrb[0].mxu0
        %2275 = vmatprep.mubr.bf16.mxu0 %v2207
        %2276 = vmatmul.mubr.bf16.gmra.mrb[0].mxu0 %v2191
        %v2277 = vpop.f32.mrb[0].mxu0
        %v2278 = vadd.f32 0.0, %v2277
        %v2279 = vpop.f32.mrb[0].mxu0
        %v2280 = vpop.f32.mrb[0].mxu0
        %v2281 = vadd.f32 0.0, %v2280
        %v2282 = vpop.f32.mrb[0].mxu0
        %2283 = vmatprep.mubr.bf16.mxu0 %v2208
        %2284 = vmatmul.mubr.bf16.gmra.mrb[0].mxu0 %v2192
        %v2285 = vpop.f32.mrb[0].mxu0
        %v2286 = vadd.f32 0.0, %v2285
        %v2287 = vpop.f32.mrb[0].mxu0
        %v2288 = vpop.f32.mrb[0].mxu0
        %v2289 = vadd.f32 0.0, %v2288
        %v2290 = vpop.f32.mrb[0].mxu0
        %2291 = vmatprep.mubr.bf16.mxu0 %v2209
        %2292 = vmatmul.mubr.bf16.gmra.mrb[0].mxu0 %v2193
        %v2293 = vpop.f32.mrb[0].mxu0
        %v2294 = vadd.f32 0.0, %v2293
        %v2295 = vpop.f32.mrb[0].mxu0
        %v2296 = vpop.f32.mrb[0].mxu0
        %v2297 = vadd.f32 0.0, %v2296
        %v2298 = vpop.f32.mrb[0].mxu0
        %2299 = vmatprep.mubr.bf16.mxu0 %v2210
        %2300 = vmatmul.mubr.bf16.gmra.mrb[0].mxu0 %v2194
        %v2301 = vpop.f32.mrb[0].mxu0
        %v2302 = vadd.f32 0.0, %v2301
        %v2303 = vpop.f32.mrb[0].mxu0
        %v2304 = vpop.f32.mrb[0].mxu0
        %v2305 = vadd.f32 0.0, %v2304
        %v2306 = vpop.f32.mrb[0].mxu0
        %2307 = vdwg.mxu0
        %v2308 = vadd.f32 %v2163, %v2246
        %v2309 = vadd.f32 %v2164, %v2249
        %v2310 = vadd.f32 %v2165, %v2254
        %v2311 = vadd.f32 %v2166, %v2257
        %v2312 = vadd.f32 %v2167, %v2262
        %v2313 = vadd.f32 %v2168, %v2265
        %v2314 = vadd.f32 %v2169, %v2270
        %v2315 = vadd.f32 %v2170, %v2273
        %v2316 = vadd.f32 %v2171, %v2278
        %v2317 = vadd.f32 %v2172, %v2281
        %v2318 = vadd.f32 %v2173, %v2286
        %v2319 = vadd.f32 %v2174, %v2289
        %v2320 = vadd.f32 %v2175, %v2294
        %v2321 = vadd.f32 %v2176, %v2297
        %v2322 = vadd.f32 %v2177, %v2302
        %v2323 = vadd.f32 %v2178, %v2305
        %2324 = vst [vmem:[#allocation2] sm:$0xff] %v2308
        %2325 = vst [vmem:[#allocation2 + $0x8] sm:$0xff] %v2309
        %2326 = vst [vmem:[#allocation2 + $0x10] sm:$0xff] %v2310
        %2327 = vst [vmem:[#allocation2 + $0x18] sm:$0xff] %v2311
        %2328 = vst [vmem:[#allocation2 + $0x20] sm:$0xff] %v2312
        %2329 = vst [vmem:[#allocation2 + $0x28] sm:$0xff] %v2313
        %2330 = vst [vmem:[#allocation2 + $0x30] sm:$0xff] %v2314
        %2331 = vst [vmem:[#allocation2 + $0x38] sm:$0xff] %v2315
        %2332 = vst [vmem:[#allocation2 + $0x40] sm:$0xff] %v2316
        %2333 = vst [vmem:[#allocation2 + $0x48] sm:$0xff] %v2317
        %2334 = vst [vmem:[#allocation2 + $0x50] sm:$0xff] %v2318
        %2335 = vst [vmem:[#allocation2 + $0x58] sm:$0xff] %v2319
        %2336 = vst [vmem:[#allocation2 + $0x60] sm:$0xff] %v2320
        %2337 = vst [vmem:[#allocation2 + $0x68] sm:$0xff] %v2321
        %2338 = vst [vmem:[#allocation2 + $0x70] sm:$0xff] %v2322
        %2339 = vst [vmem:[#allocation2 + $0x78] sm:$0xff] %v2323
        %p2340 = scmp.eq.s32.totalorder %s22, 1
        // Predicated region
        $region65: #{tpu_custom_call.1} parent=59 // pred_check
          %p2341 = pneg %p2340
        $region66: #{tpu_custom_call.1} parent=59 // pred_check_branch
          %2343 = sbr.rel (%p2341) target = $region68
        $region67: #{tpu_custom_call.1} parent=59 // pred_region
          %v2344 = vld [vmem:[#allocation2] sm:$0xff]
          %v2345 = vld [vmem:[#allocation2 + $0x8] sm:$0xff]
          %v2346 = vld [vmem:[#allocation2 + $0x10] sm:$0xff]
          %v2347 = vld [vmem:[#allocation2 + $0x18] sm:$0xff]
          %v2348 = vld [vmem:[#allocation2 + $0x20] sm:$0xff]
          %v2349 = vld [vmem:[#allocation2 + $0x28] sm:$0xff]
          %v2350 = vld [vmem:[#allocation2 + $0x30] sm:$0xff]
          %v2351 = vld [vmem:[#allocation2 + $0x38] sm:$0xff]
          %v2352 = vld [vmem:[#allocation2 + $0x40] sm:$0xff]
          %v2353 = vld [vmem:[#allocation2 + $0x48] sm:$0xff]
          %v2354 = vld [vmem:[#allocation2 + $0x50] sm:$0xff]
          %v2355 = vld [vmem:[#allocation2 + $0x58] sm:$0xff]
          %v2356 = vld [vmem:[#allocation2 + $0x60] sm:$0xff]
          %v2357 = vld [vmem:[#allocation2 + $0x68] sm:$0xff]
          %v2358 = vld [vmem:[#allocation2 + $0x70] sm:$0xff]
          %v2359 = vld [vmem:[#allocation2 + $0x78] sm:$0xff]
          %v2360 = vld [vmem:[%s6] sm:$0xff]
          %v2361 = vld [vmem:[%s6 + $0x8] sm:$0xff]
          %v2362 = vld [vmem:[%s6 + $0x10] sm:$0xff]
          %v2363 = vld [vmem:[%s6 + $0x18] sm:$0xff]
          %v2364 = vld [vmem:[%s6 + $0x20] sm:$0xff]
          %v2365 = vld [vmem:[%s6 + $0x28] sm:$0xff]
          %v2366 = vld [vmem:[%s6 + $0x30] sm:$0xff]
          %v2367 = vld [vmem:[%s6 + $0x38] sm:$0xff]
          %v2368 = vld [vmem:[%s6 + $0x40] sm:$0xff]
          %v2369 = vld [vmem:[%s6 + $0x48] sm:$0xff]
          %v2370 = vld [vmem:[%s6 + $0x50] sm:$0xff]
          %v2371 = vld [vmem:[%s6 + $0x58] sm:$0xff]
          %v2372 = vld [vmem:[%s6 + $0x60] sm:$0xff]
          %v2373 = vld [vmem:[%s6 + $0x68] sm:$0xff]
          %v2374 = vld [vmem:[%s6 + $0x70] sm:$0xff]
          %v2375 = vld [vmem:[%s6 + $0x78] sm:$0xff]
          %2377 = vset.pattern.permute.xlu0 0
          %2378 = vperm.xlu0 %2377, %v2360
          %v2379 = vpop.permute.xlu0 %2378
          %2382 = vset.pattern.permute.xlu0 0
          %2383 = vperm.xlu0 %2382, %v2361
          %v2384 = vpop.permute.xlu0 %2383
          %2387 = vset.pattern.permute.xlu0 0
          %2388 = vperm.xlu0 %2387, %v2362
          %v2389 = vpop.permute.xlu0 %2388
          %2392 = vset.pattern.permute.xlu0 0
          %2393 = vperm.xlu0 %2392, %v2363
          %v2394 = vpop.permute.xlu0 %2393
          %2397 = vset.pattern.permute.xlu0 0
          %2398 = vperm.xlu0 %2397, %v2364
          %v2399 = vpop.permute.xlu0 %2398
          %2402 = vset.pattern.permute.xlu0 0
          %2403 = vperm.xlu0 %2402, %v2365
          %v2404 = vpop.permute.xlu0 %2403
          %2407 = vset.pattern.permute.xlu0 0
          %2408 = vperm.xlu0 %2407, %v2366
          %v2409 = vpop.permute.xlu0 %2408
          %2412 = vset.pattern.permute.xlu0 0
          %2413 = vperm.xlu0 %2412, %v2367
          %v2414 = vpop.permute.xlu0 %2413
          %2417 = vset.pattern.permute.xlu0 0
          %2418 = vperm.xlu0 %2417, %v2368
          %v2419 = vpop.permute.xlu0 %2418
          %2422 = vset.pattern.permute.xlu0 0
          %2423 = vperm.xlu0 %2422, %v2369
          %v2424 = vpop.permute.xlu0 %2423
          %2427 = vset.pattern.permute.xlu0 0
          %2428 = vperm.xlu0 %2427, %v2370
          %v2429 = vpop.permute.xlu0 %2428
          %2432 = vset.pattern.permute.xlu0 0
          %2433 = vperm.xlu0 %2432, %v2371
          %v2434 = vpop.permute.xlu0 %2433
          %2437 = vset.pattern.permute.xlu0 0
          %2438 = vperm.xlu0 %2437, %v2372
          %v2439 = vpop.permute.xlu0 %2438
          %2442 = vset.pattern.permute.xlu0 0
          %2443 = vperm.xlu0 %2442, %v2373
          %v2444 = vpop.permute.xlu0 %2443
          %2447 = vset.pattern.permute.xlu0 0
          %2448 = vperm.xlu0 %2447, %v2374
          %v2449 = vpop.permute.xlu0 %2448
          %2452 = vset.pattern.permute.xlu0 0
          %2453 = vperm.xlu0 %2452, %v2375
          %v2454 = vpop.permute.xlu0 %2453
          %v2456 = vmul.f32 %v2344, %v2379
          %v2457 = vmul.f32 %v2345, %v2384
          %v2458 = vmul.f32 %v2346, %v2389
          %v2459 = vmul.f32 %v2347, %v2394
          %v2460 = vmul.f32 %v2348, %v2399
          %v2461 = vmul.f32 %v2349, %v2404
          %v2462 = vmul.f32 %v2350, %v2409
          %v2463 = vmul.f32 %v2351, %v2414
          %v2464 = vmul.f32 %v2352, %v2419
          %v2465 = vmul.f32 %v2353, %v2424
          %v2466 = vmul.f32 %v2354, %v2429
          %v2467 = vmul.f32 %v2355, %v2434
          %v2468 = vmul.f32 %v2356, %v2439
          %v2469 = vmul.f32 %v2357, %v2444
          %v2470 = vmul.f32 %v2358, %v2449
          %v2471 = vmul.f32 %v2359, %v2454
          %v2472 = vpack.c.bf16 %v2457, %v2456
          %v2473 = vpack.c.bf16 %v2459, %v2458
          %v2474 = vpack.c.bf16 %v2461, %v2460
          %v2475 = vpack.c.bf16 %v2463, %v2462
          %v2476 = vpack.c.bf16 %v2465, %v2464
          %v2477 = vpack.c.bf16 %v2467, %v2466
          %v2478 = vpack.c.bf16 %v2469, %v2468
          %v2479 = vpack.c.bf16 %v2471, %v2470
          %v2480 = vld [vmem:[%s3] sm:$0xf]
          %v2481 = vld [vmem:[%s3 + $0x4] sm:$0xf]
          %v2482 = vld [vmem:[%s3 + $0x8] sm:$0xf]
          %v2483 = vld [vmem:[%s3 + $0xc] sm:$0xf]
          %v2484 = vld [vmem:[%s3 + $0x10] sm:$0xf]
          %v2485 = vld [vmem:[%s3 + $0x14] sm:$0xf]
          %v2486 = vld [vmem:[%s3 + $0x18] sm:$0xf]
          %v2487 = vld [vmem:[%s3 + $0x1c] sm:$0xf]
          %v2488 = vld [vmem:[%s3 + $0x20] sm:$0xf]
          %v2489 = vld [vmem:[%s3 + $0x24] sm:$0xf]
          %v2490 = vld [vmem:[%s3 + $0x28] sm:$0xf]
          %v2491 = vld [vmem:[%s3 + $0x2c] sm:$0xf]
          %v2492 = vld [vmem:[%s3 + $0x30] sm:$0xf]
          %v2493 = vld [vmem:[%s3 + $0x34] sm:$0xf]
          %v2494 = vld [vmem:[%s3 + $0x38] sm:$0xf]
          %v2495 = vld [vmem:[%s3 + $0x3c] sm:$0xf]
          %v2496 = vld [vmem:[%s4] sm:$0x1]
          %v2498 = vlaneseq
          %v2499 = vshrl.u32 %v2498, 7
          %v2500 = vsub.s32 0, %v2499
          %v2501 = vrot.slane %v2496, %v2500
          %v2519 = vunpack.c.l.b16 %v2480
          %v2520 = vunpack.c.l.b16 %v2481
          %v2521 = vunpack.c.l.b16 %v2482
          %v2522 = vunpack.c.l.b16 %v2483
          %v2523 = vunpack.c.l.b16 %v2484
          %v2524 = vunpack.c.l.b16 %v2485
          %v2525 = vunpack.c.l.b16 %v2486
          %v2526 = vunpack.c.l.b16 %v2487
          %v2527 = vunpack.c.l.b16 %v2488
          %v2528 = vunpack.c.l.b16 %v2489
          %v2529 = vunpack.c.l.b16 %v2490
          %v2530 = vunpack.c.l.b16 %v2491
          %v2531 = vunpack.c.l.b16 %v2492
          %v2532 = vunpack.c.l.b16 %v2493
          %v2533 = vunpack.c.l.b16 %v2494
          %v2534 = vunpack.c.l.b16 %v2495
          %v2535 = vpack.c.b16 %v2520, %v2519
          %v2536 = vpack.c.b16 %v2522, %v2521
          %v2537 = vpack.c.b16 %v2524, %v2523
          %v2538 = vpack.c.b16 %v2526, %v2525
          %v2539 = vpack.c.b16 %v2528, %v2527
          %v2540 = vpack.c.b16 %v2530, %v2529
          %v2541 = vpack.c.b16 %v2532, %v2531
          %v2542 = vpack.c.b16 %v2534, %v2533
          %2551 = vmatprep.subr.bf16.mxu0 0
          %2552 = vmatpush1.bf16.msra.mxu0 %v2535
          %2553 = vmatprep.subr.bf16.mxu0 0
          %2554 = vmatpush1.bf16.msra.mxu0 %v2536
          %2555 = vmatprep.subr.bf16.mxu0 0
          %2556 = vmatpush1.bf16.msra.mxu0 %v2537
          %2557 = vmatprep.subr.bf16.mxu0 0
          %2558 = vmatpush1.bf16.msra.mxu0 %v2538
          %2559 = vmatprep.subr.bf16.mxu0 0
          %2560 = vmatpush1.bf16.msra.mxu0 %v2539
          %2561 = vmatprep.subr.bf16.mxu0 0
          %2562 = vmatpush1.bf16.msra.mxu0 %v2540
          %2563 = vmatprep.subr.bf16.mxu0 0
          %2564 = vmatpush1.bf16.msra.mxu0 %v2541
          %2565 = vmatprep.subr.bf16.mxu0 0
          %2566 = vmatpush1.bf16.msra.mxu0 %v2542
          %2567 = vmatprep.subr.bf16.mxu0 0
          %2568 = vmatpush1.bf16.msra.mxu0 0
          %2569 = vmatprep.subr.bf16.mxu0 0
          %2570 = vmatpush1.bf16.msra.mxu0 0
          %2571 = vmatprep.subr.bf16.mxu0 0
          %2572 = vmatpush1.bf16.msra.mxu0 0
          %2573 = vmatprep.subr.bf16.mxu0 0
          %2574 = vmatpush1.bf16.msra.mxu0 0
          %2575 = vmatprep.subr.bf16.mxu0 0
          %2576 = vmatpush1.bf16.msra.mxu0 0
          %2577 = vmatprep.subr.bf16.mxu0 0
          %2578 = vmatpush1.bf16.msra.mxu0 0
          %2579 = vmatprep.subr.bf16.mxu0 0
          %2580 = vmatpush1.bf16.msra.mxu0 0
          %2581 = vmatprep.subr.bf16.mxu0 0
          %2582 = vmatpush1.bf16.msra.mxu0 0
          %2583 = vmatprep.mubr.bf16.mxu0 0
          %2584 = vmatmul.mubr.bf16.gmra.mrb[0].mxu0 %v2472
          %v2585 = vpop.f32.mrb[0].mxu0
          %v2586 = vadd.f32 %v2501, %v2585
          %v2587 = vpop.f32.mrb[0].mxu0
          %v2588 = vpop.f32.mrb[0].mxu0
          %v2589 = vadd.f32 %v2501, %v2588
          %v2590 = vpop.f32.mrb[0].mxu0
          %2591 = vmatprep.mubr.bf16.mxu0 0
          %2592 = vmatmul.mubr.bf16.gmra.mrb[0].mxu0 %v2473
          %v2593 = vpop.f32.mrb[0].mxu0
          %v2594 = vadd.f32 %v2501, %v2593
          %v2595 = vpop.f32.mrb[0].mxu0
          %v2596 = vpop.f32.mrb[0].mxu0
          %v2597 = vadd.f32 %v2501, %v2596
          %v2598 = vpop.f32.mrb[0].mxu0
          %2599 = vmatprep.mubr.bf16.mxu0 0
          %2600 = vmatmul.mubr.bf16.gmra.mrb[0].mxu0 %v2474
          %v2601 = vpop.f32.mrb[0].mxu0
          %v2602 = vadd.f32 %v2501, %v2601
          %v2603 = vpop.f32.mrb[0].mxu0
          %v2604 = vpop.f32.mrb[0].mxu0
          %v2605 = vadd.f32 %v2501, %v2604
          %v2606 = vpop.f32.mrb[0].mxu0
          %2607 = vmatprep.mubr.bf16.mxu0 0
          %2608 = vmatmul.mubr.bf16.gmra.mrb[0].mxu0 %v2475
          %v2609 = vpop.f32.mrb[0].mxu0
          %v2610 = vadd.f32 %v2501, %v2609
          %v2611 = vpop.f32.mrb[0].mxu0
          %v2612 = vpop.f32.mrb[0].mxu0
          %v2613 = vadd.f32 %v2501, %v2612
          %v2614 = vpop.f32.mrb[0].mxu0
          %2615 = vmatprep.mubr.bf16.mxu0 0
          %2616 = vmatmul.mubr.bf16.gmra.mrb[0].mxu0 %v2476
          %v2617 = vpop.f32.mrb[0].mxu0
          %v2618 = vadd.f32 %v2501, %v2617
          %v2619 = vpop.f32.mrb[0].mxu0
          %v2620 = vpop.f32.mrb[0].mxu0
          %v2621 = vadd.f32 %v2501, %v2620
          %v2622 = vpop.f32.mrb[0].mxu0
          %2623 = vmatprep.mubr.bf16.mxu0 0
          %2624 = vmatmul.mubr.bf16.gmra.mrb[0].mxu0 %v2477
          %v2625 = vpop.f32.mrb[0].mxu0
          %v2626 = vadd.f32 %v2501, %v2625
          %v2627 = vpop.f32.mrb[0].mxu0
          %v2628 = vpop.f32.mrb[0].mxu0
          %v2629 = vadd.f32 %v2501, %v2628
          %v2630 = vpop.f32.mrb[0].mxu0
          %2631 = vmatprep.mubr.bf16.mxu0 0
          %2632 = vmatmul.mubr.bf16.gmra.mrb[0].mxu0 %v2478
          %v2633 = vpop.f32.mrb[0].mxu0
          %v2634 = vadd.f32 %v2501, %v2633
          %v2635 = vpop.f32.mrb[0].mxu0
          %v2636 = vpop.f32.mrb[0].mxu0
          %v2637 = vadd.f32 %v2501, %v2636
          %v2638 = vpop.f32.mrb[0].mxu0
          %2639 = vmatprep.mubr.bf16.mxu0 0
          %2640 = vmatmul.mubr.bf16.gmra.mrb[0].mxu0 %v2479
          %v2641 = vpop.f32.mrb[0].mxu0
          %v2642 = vadd.f32 %v2501, %v2641
          %v2643 = vpop.f32.mrb[0].mxu0
          %v2644 = vpop.f32.mrb[0].mxu0
          %v2645 = vadd.f32 %v2501, %v2644
          %v2646 = vpop.f32.mrb[0].mxu0
          %2647 = vdwg.mxu0
          %2648 = vst [vmem:[#allocation3] sm:$0xff] %v2586
          %2649 = vst [vmem:[#allocation3 + $0x8] sm:$0xff] %v2589
          %2650 = vst [vmem:[#allocation3 + $0x10] sm:$0xff] %v2594
          %2651 = vst [vmem:[#allocation3 + $0x18] sm:$0xff] %v2597
          %2652 = vst [vmem:[#allocation3 + $0x20] sm:$0xff] %v2602
          %2653 = vst [vmem:[#allocation3 + $0x28] sm:$0xff] %v2605
          %2654 = vst [vmem:[#allocation3 + $0x30] sm:$0xff] %v2610
          %2655 = vst [vmem:[#allocation3 + $0x38] sm:$0xff] %v2613
          %2656 = vst [vmem:[#allocation3 + $0x40] sm:$0xff] %v2618
          %2657 = vst [vmem:[#allocation3 + $0x48] sm:$0xff] %v2621
          %2658 = vst [vmem:[#allocation3 + $0x50] sm:$0xff] %v2626
          %2659 = vst [vmem:[#allocation3 + $0x58] sm:$0xff] %v2629
          %2660 = vst [vmem:[#allocation3 + $0x60] sm:$0xff] %v2634
          %2661 = vst [vmem:[#allocation3 + $0x68] sm:$0xff] %v2637
          %2662 = vst [vmem:[#allocation3 + $0x70] sm:$0xff] %v2642
          %2663 = vst [vmem:[#allocation3 + $0x78] sm:$0xff] %v2645
        $region68: #{tpu_custom_call.1} parent=59 // pred_fallthru
          _
        // Predicated region
        $region69: #{tpu_custom_call.1} parent=59 // pred_check
          %p2664 = pneg %p260
        $region70: #{tpu_custom_call.1} parent=59 // pred_check_branch
          %2666 = sbr.rel (%p2664) target = $region72
        $region71: #{tpu_custom_call.1} parent=59 // pred_region
          %s2668 = ssub.s32 2048, 2048
          %2669 = vsyncadd [#allocation4], %s2668
          %s2670 = sshll.u32 [#allocation3], 4
          %s2671 = int_to_ptr.vmem [resolvable:$true] %s2670
          %2676 = dma.vmem_to_hbm [thread:$0]  %s2671, 2048, %s10, [#allocation4], 128, 128, 8
        $region72: #{tpu_custom_call.1} parent=59 // pred_fallthru
          _
        // Predicated region
        $region73: #{tpu_custom_call.1} parent=59 // pred_check
          %p2677 = pneg %p260
        $region74: #{tpu_custom_call.1} parent=59 // pred_check_branch
          %2679 = sbr.rel (%p2677) target = $region76
        $region75: #{tpu_custom_call.1} parent=59 // pred_region
          %2680 = dma.done [#allocation4], 2048
        $region76: #{tpu_custom_call.1} parent=59 // pred_fallthru
          _
      $region60: #{tpu_custom_call.1} parent=5 // pred_fallthru
        _
      %p2681 = scmp.le.s32.totalorder 2, %s17
      // Predicated region
      $region77: #{tpu_custom_call.1} parent=5 // pred_check
        %p2682 = pneg %p2681
      $region78: #{tpu_custom_call.1} parent=5 // pred_check_branch
        %2684 = sbr.rel (%p2682) target = $region80
      $region79: #{tpu_custom_call.1} parent=5 // pred_region
        %s2685 = ssub.s32 %s17, 2
      $region80: #{tpu_custom_call.1} parent=5 // pred_fallthru
        _
    $region6: #{tpu_custom_call.1} parent=1 // loop_footer
      %s21 = sadd.s32 1, %s17
    $region7: #{tpu_custom_call.1} parent=1 // loop_footer_branch
      %16 = sbr.rel target = $region3
    $region8: #{tpu_custom_call.1} parent=1 // loop_exit
      _
    %2686 = vsyncpa [#allocation4], 1
    %s2687 = scalar_lea.sflag [#allocation4], 1
    %2688 = vsyncpa %s2687, 1

</llo_original>
